<compile_context>
chip_gen: v6e
topology: v6e:2x2x1
jax: 0.10.0
libtpu: 0.0.40
codegen_flags: <defaults>
</compile_context>

<pallas_src>
import jax
import jax.numpy as jnp
from jax.experimental import pallas as pl
from jax.experimental.pallas import tpu as pltpu


# --------------------------------------------------------------------------
# In-kernel helpers
# --------------------------------------------------------------------------

def _shift_causal(x, shift):
    """Return y with y[t] = x[t - shift], zero for t < shift (causal pad)."""
    if shift == 0:
        return x
    rolled = pltpu.roll(x, shift=shift, axis=0)
    row = jax.lax.broadcasted_iota(jnp.int32, x.shape, 0)
    return jnp.where(row >= shift, rolled, 0.0)


def _causal_conv_relu(x, w, b, *, K, dil):
    """weight_norm(Conv1d(pad=(K-1)*dil)) + Chomp1d + ReLU, channels-last.

    x: (T, Cin), w: (K, Cin, Cout), b: (1, Cout) — all in-kernel values.
    """
    acc = jnp.dot(_shift_causal(x, (K - 1) * dil), w[0],
                  preferred_element_type=jnp.float32)
    for k in range(1, K):
        acc = acc + jnp.dot(_shift_causal(x, (K - 1 - k) * dil), w[k],
                            preferred_element_type=jnp.float32)
    # bias broadcast once per conv (hoisted out of the tap loop)
    return jnp.maximum(acc + b, 0.0)


# --------------------------------------------------------------------------
# Fused TCN stack kernel (all TemporalBlocks in one pallas_call)
# --------------------------------------------------------------------------

def _make_tcn_stack_kernel(block_meta):
    # block_meta: tuple of (dilation, K, has_downsample) per block
    def kernel(*refs):
        x_ref, out_ref = refs[0], refs[-1]
        wrefs = refs[1:-1]
        h = x_ref[...]                       # (T, Cin0); stays on-chip
        i = 0
        for dil, K, has_ds in block_meta:
            w1 = wrefs[i][...]; b1 = wrefs[i + 1][...]
            w2 = wrefs[i + 2][...]; b2 = wrefs[i + 3][...]
            i += 4
            y = _causal_conv_relu(h, w1, b1, K=K, dil=dil)
            y = _causal_conv_relu(y, w2, b2, K=K, dil=dil)
            if has_ds:                       # 1x1 downsample conv residual
                wd = wrefs[i][...]; bd = wrefs[i + 1][...]
                i += 2
                res = jnp.dot(h, wd, preferred_element_type=jnp.float32) + bd
            else:
                res = h
            h = jnp.maximum(y + res, 0.0)
        out_ref[...] = h
    return kernel


def tcn_stack(x, blocks):
    B, T, Cin0 = x.shape
    C_last = blocks[-1]['w2'].shape[2]
    const2 = lambda b: (0, 0)
    const3 = lambda b: (0, 0, 0)

    inputs = [x]
    in_specs = [pl.BlockSpec((None, T, Cin0), lambda b: (b, 0, 0))]
    meta = []
    for blk in blocks:
        K, ci, co = blk['w1'].shape
        meta.append((blk['dilation'], K, 'wd' in blk))
        inputs += [blk['w1'], blk['b1'].reshape(1, co),
                   blk['w2'], blk['b2'].reshape(1, co)]
        in_specs += [pl.BlockSpec((K, ci, co), const3),
                     pl.BlockSpec((1, co), const2),
                     pl.BlockSpec((K, co, co), const3),
                     pl.BlockSpec((1, co), const2)]
        if 'wd' in blk:
            inputs += [blk['wd'], blk['bd'].reshape(1, co)]
            in_specs += [pl.BlockSpec((ci, co), const2),
                         pl.BlockSpec((1, co), const2)]

    return pl.pallas_call(
        _make_tcn_stack_kernel(tuple(meta)),
        out_shape=jax.ShapeDtypeStruct((B, T, C_last), jnp.float32),
        grid=(B,),
        in_specs=in_specs,
        out_specs=pl.BlockSpec((None, T, C_last), lambda b: (b, 0, 0)),
        compiler_params=pltpu.CompilerParams(
            dimension_semantics=("parallel",)),
    )(*inputs)


# --------------------------------------------------------------------------
# Fused head kernel: attention pooling + LayerNorm + fc1 + image branch + fc2
# --------------------------------------------------------------------------

def _head_kernel(out_ref, imgp_ref, wproxy_ref, wfc_ref, bfc_ref,
                 gamma_ref, beta_ref, w1_ref, b1_ref,
                 w2a_ref, w2b_ref, b2_ref, o_ref):
    out = out_ref[...]                                   # (T, C)

    # Global attention: softmax over T of the channel-mean.
    attn = jnp.mean(out, axis=1, keepdims=True)          # (T, 1)
    attn = attn - jnp.max(attn, axis=0, keepdims=True)
    e = jnp.exp(attn)
    inv = pl.reciprocal(jnp.sum(e, axis=0, keepdims=True), approx=True)
    attn = e * inv
    pooled = jnp.sum(attn * out, axis=0, keepdims=True)  # (1, C) == bmm+squeeze

    # LayerNorm (dropout = identity).
    mu = jnp.mean(pooled, axis=1, keepdims=True)
    var = jnp.mean((pooled - mu) ** 2, axis=1, keepdims=True)
    ln = ((pooled - mu) * jax.lax.rsqrt(var + 1e-5) * gamma_ref[...]
          + beta_ref[...])

    # fc1 + ReLU.
    h = jnp.maximum(jnp.dot(ln, w1_ref[...],
                            preferred_element_type=jnp.float32) + b1_ref[...],
                    0.0)

    # Image branch: EfficientNet-proxy projection + feature FC + ReLU.
    bb = jnp.maximum(jnp.dot(imgp_ref[...], wproxy_ref[...],
                             preferred_element_type=jnp.float32), 0.0)
    img = jnp.maximum(jnp.dot(bb, wfc_ref[...],
                              preferred_element_type=jnp.float32)
                      + bfc_ref[...], 0.0)

    # Concat-free fc2: weight split into TCN-branch and image-branch halves.
    o_ref[...] = (jnp.dot(h, w2a_ref[...], preferred_element_type=jnp.float32)
                  + jnp.dot(img, w2b_ref[...], preferred_element_type=jnp.float32)
                  + b2_ref[...])


def fused_head(tcn_out, img_pooled, params):
    B, T, C = tcn_out.shape
    nc = params['fc2_b'].shape[0]
    hidden = params['eff_fc_b'].shape[0]
    eff_in = params['eff_backbone_w'].shape[1]
    p = img_pooled.shape[1]
    w2a = params['fc2_w'][:C]     # multiplies the TCN branch
    w2b = params['fc2_w'][C:]     # multiplies the image-feature branch
    imgp = img_pooled.reshape(B, 1, p)
    const2 = lambda b: (0, 0)

    out = pl.pallas_call(
        _head_kernel,
        out_shape=jax.ShapeDtypeStruct((B, 1, nc), jnp.float32),
        grid=(B,),
        in_specs=[
            pl.BlockSpec((None, T, C), lambda b: (b, 0, 0)),
            pl.BlockSpec((None, 1, p), lambda b: (b, 0, 0)),
            pl.BlockSpec((p, eff_in), const2),
            pl.BlockSpec((eff_in, hidden), const2),
            pl.BlockSpec((1, hidden), const2),
            pl.BlockSpec((1, C), const2),
            pl.BlockSpec((1, C), const2),
            pl.BlockSpec((C, C), const2),
            pl.BlockSpec((1, C), const2),
            pl.BlockSpec((C, nc), const2),
            pl.BlockSpec((hidden, nc), const2),
            pl.BlockSpec((1, nc), const2),
        ],
        out_specs=pl.BlockSpec((None, 1, nc), lambda b: (b, 0, 0)),
        compiler_params=pltpu.CompilerParams(
            dimension_semantics=("parallel",)),
    )(tcn_out, imgp, params['eff_backbone_w'], params['eff_fc_w'],
      params['eff_fc_b'].reshape(1, hidden),
      params['ln_gamma'].reshape(1, C), params['ln_beta'].reshape(1, C),
      params['fc1_w'], params['fc1_b'].reshape(1, C),
      w2a, w2b, params['fc2_b'].reshape(1, nc))
    return out.reshape(B, nc)


# --------------------------------------------------------------------------
# Model wrapper
# --------------------------------------------------------------------------

def model_forward(params, x, images):
    # x: (B, T, input_dim) — same tensor the PyTorch module receives.
    tcn_out = tcn_stack(x, params['tcn'])
    # TODO(synk): the pretrained EfficientNet-b0 MBConv backbone has no clean
    # Pallas equivalent; it is replaced by a deterministic global-avg-pool +
    # fixed linear projection producing features with b0's _fc input width.
    img_pooled = jnp.mean(images, axis=(2, 3))            # (B, 3) glue
    return fused_head(tcn_out, img_pooled, params)


def init_params(key, input_dim, num_channels, kernel_size, hidden_dim,
                num_classes, eff_in_features=1280):
    ks = iter(jax.random.split(key, 64))

    def nrm(shape, scale):
        return scale * jax.random.normal(next(ks), shape, jnp.float32)

    tcn = []
    in_c = input_dim
    for i, out_c in enumerate(num_channels):
        blk = {
            'dilation': 2 ** i,
            'w1': nrm((kernel_size, in_c, out_c), 0.01),
            'b1': nrm((out_c,), 0.01),
            'w2': nrm((kernel_size, out_c, out_c), 0.01),
            'b2': nrm((out_c,), 0.01),
        }
        if in_c != out_c:   # downsample 1x1 conv
            blk['wd'] = nrm((in_c, out_c), 0.01)
            blk['bd'] = nrm((out_c,), 0.01)
        tcn.append(blk)
        in_c = out_c
    C2 = num_channels[-1]
    return {
        'tcn': tcn,
        'ln_gamma': jnp.ones((C2,), jnp.float32),
        'ln_beta': jnp.zeros((C2,), jnp.float32),
        'fc1_w': nrm((C2, C2), 0.05),
        'fc1_b': nrm((C2,), 0.05),
        'fc2_w': nrm((C2 + hidden_dim, num_classes), 0.05),
        'fc2_b': nrm((num_classes,), 0.05),
        'eff_backbone_w': nrm((3, eff_in_features), 0.1),
        'eff_fc_w': nrm((eff_in_features, hidden_dim), 0.02),
        'eff_fc_b': nrm((hidden_dim,), 0.02),
    }


# --------------------------------------------------------------------------
# Pure-JAX reference (same math) for correctness checking
# --------------------------------------------------------------------------

def _ref_conv(x, w, b, dil):
    B, T, _ = x.shape
    K = w.shape[0]
    pad = (K - 1) * dil
    xp = jnp.pad(x, ((0, 0), (pad, 0), (0, 0)))
    y = b.reshape(1, 1, -1)
    for k in range(K):
        y = y + jnp.einsum('bti,io->bto', xp[:, k * dil:k * dil + T], w[k])
    return jnp.maximum(y, 0.0)


def ref_forward(params, x, images):
    h = x
    for blk in params['tcn']:
        d = blk['dilation']
        y = _ref_conv(h, blk['w1'], blk['b1'], d)
        y = _ref_conv(y, blk['w2'], blk['b2'], d)
        res = (jnp.einsum('bti,io->bto', h, blk['wd']) + blk['bd']
               if 'wd' in blk else h)
        h = jnp.maximum(y + res, 0.0)
    attn = jax.nn.softmax(jnp.mean(h, axis=2), axis=-1)
    pooled = jnp.einsum('bt,btc->bc', attn, h)
    mu = jnp.mean(pooled, axis=-1, keepdims=True)
    var = jnp.mean((pooled - mu) ** 2, axis=-1, keepdims=True)
    ln = (pooled - mu) / jnp.sqrt(var + 1e-5) * params['ln_gamma'] + params['ln_beta']
    hh = jnp.maximum(ln @ params['fc1_w'] + params['fc1_b'], 0.0)
    bb = jnp.maximum(jnp.mean(images, axis=(2, 3)) @ params['eff_backbone_w'], 0.0)
    img = jnp.maximum(bb @ params['eff_fc_w'] + params['eff_fc_b'], 0.0)
    comb = jnp.concatenate([hh, img], axis=1)
    return comb @ params['fc2_w'] + params['fc2_b']


# --------------------------------------------------------------------------

if __name__ == "__main__":
    B, T, input_dim = 2, 16, 8
    num_channels = [16, 32]
    kernel_size = 3
    hidden_dim = 16
    num_classes = 5

    key = jax.random.PRNGKey(0)
    kx, kimg, kp = jax.random.split(key, 3)
    x = jax.random.normal(kx, (B, T, input_dim), jnp.float32)
    images = jax.random.normal(kimg, (B, 3, 8, 8), jnp.float32)
    params = init_params(kp, input_dim, num_channels, kernel_size,
                         hidden_dim, num_classes)

    logits = jax.block_until_ready(model_forward(params, x, images))
    assert logits.shape == (B, num_classes)

    ref = ref_forward(params, x, images)
    if not jnp.allclose(logits, ref, atol=2e-3, rtol=2e-3):
        raise AssertionError(f"mismatch vs reference:\n{logits}\n{ref}")

    print("KERNEL_OK")
</pallas_src>

<mosaic_0001>
module attributes {stable_mosaic.version = 11 : i64} {
  func.func @kernel(%arg0: i32, %arg1: memref<1x16x8xf32, #tpu.memory_space<vmem>>, %arg2: memref<3x8x16xf32, #tpu.memory_space<vmem>>, %arg3: memref<1x16xf32, #tpu.memory_space<vmem>>, %arg4: memref<3x16x16xf32, #tpu.memory_space<vmem>>, %arg5: memref<1x16xf32, #tpu.memory_space<vmem>>, %arg6: memref<8x16xf32, #tpu.memory_space<vmem>>, %arg7: memref<1x16xf32, #tpu.memory_space<vmem>>, %arg8: memref<3x16x32xf32, #tpu.memory_space<vmem>>, %arg9: memref<1x32xf32, #tpu.memory_space<vmem>>, %arg10: memref<3x32x32xf32, #tpu.memory_space<vmem>>, %arg11: memref<1x32xf32, #tpu.memory_space<vmem>>, %arg12: memref<16x32xf32, #tpu.memory_space<vmem>>, %arg13: memref<1x32xf32, #tpu.memory_space<vmem>>, %arg14: memref<1x16x32xf32, #tpu.memory_space<vmem>>) attributes {dimension_semantics = [#tpu.dimension_semantics<parallel>], iteration_bounds = array<i64: 2>, scalar_prefetch = 0 : i64, scratch_operands = 0 : i64, tpu.core_type = #tpu.core_type<tc>, window_params = [{transform_indices = @transform_0, window_bounds = array<i64: 1, 16, 8>}, {pipeline_mode = #tpu.pipeline_mode<synchronous>, transform_indices = @transform_1, window_bounds = array<i64: 3, 8, 16>}, {pipeline_mode = #tpu.pipeline_mode<synchronous>, transform_indices = @transform_2, window_bounds = array<i64: 1, 16>}, {pipeline_mode = #tpu.pipeline_mode<synchronous>, transform_indices = @transform_3, window_bounds = array<i64: 3, 16, 16>}, {pipeline_mode = #tpu.pipeline_mode<synchronous>, transform_indices = @transform_4, window_bounds = array<i64: 1, 16>}, {pipeline_mode = #tpu.pipeline_mode<synchronous>, transform_indices = @transform_5, window_bounds = array<i64: 8, 16>}, {pipeline_mode = #tpu.pipeline_mode<synchronous>, transform_indices = @transform_6, window_bounds = array<i64: 1, 16>}, {pipeline_mode = #tpu.pipeline_mode<synchronous>, transform_indices = @transform_7, window_bounds = array<i64: 3, 16, 32>}, {pipeline_mode = #tpu.pipeline_mode<synchronous>, transform_indices = @transform_8, window_bounds = array<i64: 1, 32>}, {pipeline_mode = #tpu.pipeline_mode<synchronous>, transform_indices = @transform_9, window_bounds = array<i64: 3, 32, 32>}, {pipeline_mode = #tpu.pipeline_mode<synchronous>, transform_indices = @transform_10, window_bounds = array<i64: 1, 32>}, {pipeline_mode = #tpu.pipeline_mode<synchronous>, transform_indices = @transform_11, window_bounds = array<i64: 16, 32>}, {pipeline_mode = #tpu.pipeline_mode<synchronous>, transform_indices = @transform_12, window_bounds = array<i64: 1, 32>}, {transform_indices = @transform_13, window_bounds = array<i64: 1, 16, 32>}]} {
    %c0 = arith.constant 0 : index
    %c0_0 = arith.constant 0 : index
    %c0_1 = arith.constant 0 : index
    %0 = vector.load %arg1[%c0, %c0_0, %c0_1] : memref<1x16x8xf32, #tpu.memory_space<vmem>>, vector<1x16x8xf32>
    %1 = vector.shape_cast %0 : vector<1x16x8xf32> to vector<16x8xf32>
    %c0_2 = arith.constant 0 : index
    %c0_3 = arith.constant 0 : index
    %c0_4 = arith.constant 0 : index
    %2 = vector.load %arg2[%c0_2, %c0_3, %c0_4] : memref<3x8x16xf32, #tpu.memory_space<vmem>>, vector<3x8x16xf32>
    %c0_5 = arith.constant 0 : index
    %c0_6 = arith.constant 0 : index
    %3 = vector.load %arg3[%c0_5, %c0_6] : memref<1x16xf32, #tpu.memory_space<vmem>>, vector<1x16xf32>
    %c0_7 = arith.constant 0 : index
    %c0_8 = arith.constant 0 : index
    %c0_9 = arith.constant 0 : index
    %4 = vector.load %arg4[%c0_7, %c0_8, %c0_9] : memref<3x16x16xf32, #tpu.memory_space<vmem>>, vector<3x16x16xf32>
    %c0_10 = arith.constant 0 : index
    %c0_11 = arith.constant 0 : index
    %5 = vector.load %arg5[%c0_10, %c0_11] : memref<1x16xf32, #tpu.memory_space<vmem>>, vector<1x16xf32>
    %c2_i32 = arith.constant 2 : i32
    %6 = tpu.dynamic_rotate %1 by %c2_i32 dim 0 : vector<16x8xf32>, i32 -> vector<16x8xf32>
    %7 = tpu.iota {dimensions = array<i32: 0>} : vector<16x8xi32>
    %c2_i32_12 = arith.constant 2 : i32
    %8 = vector.broadcast %c2_i32_12 : i32 to vector<16x8xi32>
    %9 = arith.cmpi sge, %7, %8 : vector<16x8xi32>
    %cst = arith.constant 0.000000e+00 : f32
    %10 = vector.broadcast %cst : f32 to vector<16x8xf32>
    %11 = arith.select %9, %6, %10 : vector<16x8xi1>, vector<16x8xf32>
    %12 = vector.extract_strided_slice %2 {offsets = [0, 0, 0], sizes = [1, 8, 16], strides = [1, 1, 1]} : vector<3x8x16xf32> to vector<1x8x16xf32>
    %13 = vector.shape_cast %12 : vector<1x8x16xf32> to vector<8x16xf32>
    %cst_13 = arith.constant dense<0.000000e+00> : vector<16x16xf32>
    %14 = tpu.matmul %11, %13, %cst_13 {dimension_numbers = #tpu.dot_dimension_numbers<[1], [0], [0], [1], [0, 0, 1, 1], [], []>} : vector<16x8xf32>, vector<8x16xf32>, vector<16x16xf32> -> vector<16x16xf32>
    %c1_i32 = arith.constant 1 : i32
    %15 = tpu.dynamic_rotate %1 by %c1_i32 dim 0 : vector<16x8xf32>, i32 -> vector<16x8xf32>
    %16 = tpu.iota {dimensions = array<i32: 0>} : vector<16x8xi32>
    %c1_i32_14 = arith.constant 1 : i32
    %17 = vector.broadcast %c1_i32_14 : i32 to vector<16x8xi32>
    %18 = arith.cmpi sge, %16, %17 : vector<16x8xi32>
    %cst_15 = arith.constant 0.000000e+00 : f32
    %19 = vector.broadcast %cst_15 : f32 to vector<16x8xf32>
    %20 = arith.select %18, %15, %19 : vector<16x8xi1>, vector<16x8xf32>
    %21 = vector.extract_strided_slice %2 {offsets = [1, 0, 0], sizes = [1, 8, 16], strides = [1, 1, 1]} : vector<3x8x16xf32> to vector<1x8x16xf32>
    %22 = vector.shape_cast %21 : vector<1x8x16xf32> to vector<8x16xf32>
    %cst_16 = arith.constant dense<0.000000e+00> : vector<16x16xf32>
    %23 = tpu.matmul %20, %22, %cst_16 {dimension_numbers = #tpu.dot_dimension_numbers<[1], [0], [0], [1], [0, 0, 1, 1], [], []>} : vector<16x8xf32>, vector<8x16xf32>, vector<16x16xf32> -> vector<16x16xf32>
    %24 = arith.addf %14, %23 : vector<16x16xf32>
    %25 = vector.extract_strided_slice %2 {offsets = [2, 0, 0], sizes = [1, 8, 16], strides = [1, 1, 1]} : vector<3x8x16xf32> to vector<1x8x16xf32>
    %26 = vector.shape_cast %25 : vector<1x8x16xf32> to vector<8x16xf32>
    %cst_17 = arith.constant dense<0.000000e+00> : vector<16x16xf32>
    %27 = tpu.matmul %1, %26, %cst_17 {dimension_numbers = #tpu.dot_dimension_numbers<[1], [0], [0], [1], [0, 0, 1, 1], [], []>} : vector<16x8xf32>, vector<8x16xf32>, vector<16x16xf32> -> vector<16x16xf32>
    %28 = arith.addf %24, %27 : vector<16x16xf32>
    %29 = vector.broadcast %3 : vector<1x16xf32> to vector<16x16xf32>
    %30 = arith.addf %28, %29 : vector<16x16xf32>
    %cst_18 = arith.constant 0.000000e+00 : f32
    %31 = vector.broadcast %cst_18 : f32 to vector<16x16xf32>
    %32 = arith.maximumf %30, %31 : vector<16x16xf32>
    %c2_i32_19 = arith.constant 2 : i32
    %33 = tpu.dynamic_rotate %32 by %c2_i32_19 dim 0 : vector<16x16xf32>, i32 -> vector<16x16xf32>
    %34 = tpu.iota {dimensions = array<i32: 0>} : vector<16x16xi32>
    %c2_i32_20 = arith.constant 2 : i32
    %35 = vector.broadcast %c2_i32_20 : i32 to vector<16x16xi32>
    %36 = arith.cmpi sge, %34, %35 : vector<16x16xi32>
    %cst_21 = arith.constant 0.000000e+00 : f32
    %37 = vector.broadcast %cst_21 : f32 to vector<16x16xf32>
    %38 = arith.select %36, %33, %37 : vector<16x16xi1>, vector<16x16xf32>
    %39 = vector.extract_strided_slice %4 {offsets = [0, 0, 0], sizes = [1, 16, 16], strides = [1, 1, 1]} : vector<3x16x16xf32> to vector<1x16x16xf32>
    %40 = vector.shape_cast %39 : vector<1x16x16xf32> to vector<16x16xf32>
    %cst_22 = arith.constant dense<0.000000e+00> : vector<16x16xf32>
    %41 = tpu.matmul %38, %40, %cst_22 {dimension_numbers = #tpu.dot_dimension_numbers<[1], [0], [0], [1], [0, 0, 1, 1], [], []>} : vector<16x16xf32>, vector<16x16xf32>, vector<16x16xf32> -> vector<16x16xf32>
    %c1_i32_23 = arith.constant 1 : i32
    %42 = tpu.dynamic_rotate %32 by %c1_i32_23 dim 0 : vector<16x16xf32>, i32 -> vector<16x16xf32>
    %43 = tpu.iota {dimensions = array<i32: 0>} : vector<16x16xi32>
    %c1_i32_24 = arith.constant 1 : i32
    %44 = vector.broadcast %c1_i32_24 : i32 to vector<16x16xi32>
    %45 = arith.cmpi sge, %43, %44 : vector<16x16xi32>
    %cst_25 = arith.constant 0.000000e+00 : f32
    %46 = vector.broadcast %cst_25 : f32 to vector<16x16xf32>
    %47 = arith.select %45, %42, %46 : vector<16x16xi1>, vector<16x16xf32>
    %48 = vector.extract_strided_slice %4 {offsets = [1, 0, 0], sizes = [1, 16, 16], strides = [1, 1, 1]} : vector<3x16x16xf32> to vector<1x16x16xf32>
    %49 = vector.shape_cast %48 : vector<1x16x16xf32> to vector<16x16xf32>
    %cst_26 = arith.constant dense<0.000000e+00> : vector<16x16xf32>
    %50 = tpu.matmul %47, %49, %cst_26 {dimension_numbers = #tpu.dot_dimension_numbers<[1], [0], [0], [1], [0, 0, 1, 1], [], []>} : vector<16x16xf32>, vector<16x16xf32>, vector<16x16xf32> -> vector<16x16xf32>
    %51 = arith.addf %41, %50 : vector<16x16xf32>
    %52 = vector.extract_strided_slice %4 {offsets = [2, 0, 0], sizes = [1, 16, 16], strides = [1, 1, 1]} : vector<3x16x16xf32> to vector<1x16x16xf32>
    %53 = vector.shape_cast %52 : vector<1x16x16xf32> to vector<16x16xf32>
    %cst_27 = arith.constant dense<0.000000e+00> : vector<16x16xf32>
    %54 = tpu.matmul %32, %53, %cst_27 {dimension_numbers = #tpu.dot_dimension_numbers<[1], [0], [0], [1], [0, 0, 1, 1], [], []>} : vector<16x16xf32>, vector<16x16xf32>, vector<16x16xf32> -> vector<16x16xf32>
    %55 = arith.addf %51, %54 : vector<16x16xf32>
    %56 = vector.broadcast %5 : vector<1x16xf32> to vector<16x16xf32>
    %57 = arith.addf %55, %56 : vector<16x16xf32>
    %cst_28 = arith.constant 0.000000e+00 : f32
    %58 = vector.broadcast %cst_28 : f32 to vector<16x16xf32>
    %59 = arith.maximumf %57, %58 : vector<16x16xf32>
    %c0_29 = arith.constant 0 : index
    %c0_30 = arith.constant 0 : index
    %60 = vector.load %arg6[%c0_29, %c0_30] : memref<8x16xf32, #tpu.memory_space<vmem>>, vector<8x16xf32>
    %c0_31 = arith.constant 0 : index
    %c0_32 = arith.constant 0 : index
    %61 = vector.load %arg7[%c0_31, %c0_32] : memref<1x16xf32, #tpu.memory_space<vmem>>, vector<1x16xf32>
    %cst_33 = arith.constant dense<0.000000e+00> : vector<16x16xf32>
    %62 = tpu.matmul %1, %60, %cst_33 {dimension_numbers = #tpu.dot_dimension_numbers<[1], [0], [0], [1], [0, 0, 1, 1], [], []>} : vector<16x8xf32>, vector<8x16xf32>, vector<16x16xf32> -> vector<16x16xf32>
    %63 = vector.broadcast %61 : vector<1x16xf32> to vector<16x16xf32>
    %64 = arith.addf %62, %63 : vector<16x16xf32>
    %65 = arith.addf %59, %64 : vector<16x16xf32>
    %cst_34 = arith.constant 0.000000e+00 : f32
    %66 = vector.broadcast %cst_34 : f32 to vector<16x16xf32>
    %67 = arith.maximumf %65, %66 : vector<16x16xf32>
    %c0_35 = arith.constant 0 : index
    %c0_36 = arith.constant 0 : index
    %c0_37 = arith.constant 0 : index
    %68 = vector.load %arg8[%c0_35, %c0_36, %c0_37] : memref<3x16x32xf32, #tpu.memory_space<vmem>>, vector<3x16x32xf32>
    %c0_38 = arith.constant 0 : index
    %c0_39 = arith.constant 0 : index
    %69 = vector.load %arg9[%c0_38, %c0_39] : memref<1x32xf32, #tpu.memory_space<vmem>>, vector<1x32xf32>
    %c0_40 = arith.constant 0 : index
    %c0_41 = arith.constant 0 : index
    %c0_42 = arith.constant 0 : index
    %70 = vector.load %arg10[%c0_40, %c0_41, %c0_42] : memref<3x32x32xf32, #tpu.memory_space<vmem>>, vector<3x32x32xf32>
    %c0_43 = arith.constant 0 : index
    %c0_44 = arith.constant 0 : index
    %71 = vector.load %arg11[%c0_43, %c0_44] : memref<1x32xf32, #tpu.memory_space<vmem>>, vector<1x32xf32>
    %c4_i32 = arith.constant 4 : i32
    %72 = tpu.dynamic_rotate %67 by %c4_i32 dim 0 : vector<16x16xf32>, i32 -> vector<16x16xf32>
    %73 = tpu.iota {dimensions = array<i32: 0>} : vector<16x16xi32>
    %c4_i32_45 = arith.constant 4 : i32
    %74 = vector.broadcast %c4_i32_45 : i32 to vector<16x16xi32>
    %75 = arith.cmpi sge, %73, %74 : vector<16x16xi32>
    %cst_46 = arith.constant 0.000000e+00 : f32
    %76 = vector.broadcast %cst_46 : f32 to vector<16x16xf32>
    %77 = arith.select %75, %72, %76 : vector<16x16xi1>, vector<16x16xf32>
    %78 = vector.extract_strided_slice %68 {offsets = [0, 0, 0], sizes = [1, 16, 32], strides = [1, 1, 1]} : vector<3x16x32xf32> to vector<1x16x32xf32>
    %79 = vector.shape_cast %78 : vector<1x16x32xf32> to vector<16x32xf32>
    %cst_47 = arith.constant dense<0.000000e+00> : vector<16x32xf32>
    %80 = tpu.matmul %77, %79, %cst_47 {dimension_numbers = #tpu.dot_dimension_numbers<[1], [0], [0], [1], [0, 0, 1, 1], [], []>} : vector<16x16xf32>, vector<16x32xf32>, vector<16x32xf32> -> vector<16x32xf32>
    %c2_i32_48 = arith.constant 2 : i32
    %81 = tpu.dynamic_rotate %67 by %c2_i32_48 dim 0 : vector<16x16xf32>, i32 -> vector<16x16xf32>
    %82 = tpu.iota {dimensions = array<i32: 0>} : vector<16x16xi32>
    %c2_i32_49 = arith.constant 2 : i32
    %83 = vector.broadcast %c2_i32_49 : i32 to vector<16x16xi32>
    %84 = arith.cmpi sge, %82, %83 : vector<16x16xi32>
    %cst_50 = arith.constant 0.000000e+00 : f32
    %85 = vector.broadcast %cst_50 : f32 to vector<16x16xf32>
    %86 = arith.select %84, %81, %85 : vector<16x16xi1>, vector<16x16xf32>
    %87 = vector.extract_strided_slice %68 {offsets = [1, 0, 0], sizes = [1, 16, 32], strides = [1, 1, 1]} : vector<3x16x32xf32> to vector<1x16x32xf32>
    %88 = vector.shape_cast %87 : vector<1x16x32xf32> to vector<16x32xf32>
    %cst_51 = arith.constant dense<0.000000e+00> : vector<16x32xf32>
    %89 = tpu.matmul %86, %88, %cst_51 {dimension_numbers = #tpu.dot_dimension_numbers<[1], [0], [0], [1], [0, 0, 1, 1], [], []>} : vector<16x16xf32>, vector<16x32xf32>, vector<16x32xf32> -> vector<16x32xf32>
    %90 = arith.addf %80, %89 : vector<16x32xf32>
    %91 = vector.extract_strided_slice %68 {offsets = [2, 0, 0], sizes = [1, 16, 32], strides = [1, 1, 1]} : vector<3x16x32xf32> to vector<1x16x32xf32>
    %92 = vector.shape_cast %91 : vector<1x16x32xf32> to vector<16x32xf32>
    %cst_52 = arith.constant dense<0.000000e+00> : vector<16x32xf32>
    %93 = tpu.matmul %67, %92, %cst_52 {dimension_numbers = #tpu.dot_dimension_numbers<[1], [0], [0], [1], [0, 0, 1, 1], [], []>} : vector<16x16xf32>, vector<16x32xf32>, vector<16x32xf32> -> vector<16x32xf32>
    %94 = arith.addf %90, %93 : vector<16x32xf32>
    %95 = vector.broadcast %69 : vector<1x32xf32> to vector<16x32xf32>
    %96 = arith.addf %94, %95 : vector<16x32xf32>
    %cst_53 = arith.constant 0.000000e+00 : f32
    %97 = vector.broadcast %cst_53 : f32 to vector<16x32xf32>
    %98 = arith.maximumf %96, %97 : vector<16x32xf32>
    %c4_i32_54 = arith.constant 4 : i32
    %99 = tpu.dynamic_rotate %98 by %c4_i32_54 dim 0 : vector<16x32xf32>, i32 -> vector<16x32xf32>
    %100 = tpu.iota {dimensions = array<i32: 0>} : vector<16x32xi32>
    %c4_i32_55 = arith.constant 4 : i32
    %101 = vector.broadcast %c4_i32_55 : i32 to vector<16x32xi32>
    %102 = arith.cmpi sge, %100, %101 : vector<16x32xi32>
    %cst_56 = arith.constant 0.000000e+00 : f32
    %103 = vector.broadcast %cst_56 : f32 to vector<16x32xf32>
    %104 = arith.select %102, %99, %103 : vector<16x32xi1>, vector<16x32xf32>
    %105 = vector.extract_strided_slice %70 {offsets = [0, 0, 0], sizes = [1, 32, 32], strides = [1, 1, 1]} : vector<3x32x32xf32> to vector<1x32x32xf32>
    %106 = vector.shape_cast %105 : vector<1x32x32xf32> to vector<32x32xf32>
    %cst_57 = arith.constant dense<0.000000e+00> : vector<16x32xf32>
    %107 = tpu.matmul %104, %106, %cst_57 {dimension_numbers = #tpu.dot_dimension_numbers<[1], [0], [0], [1], [0, 0, 1, 1], [], []>} : vector<16x32xf32>, vector<32x32xf32>, vector<16x32xf32> -> vector<16x32xf32>
    %c2_i32_58 = arith.constant 2 : i32
    %108 = tpu.dynamic_rotate %98 by %c2_i32_58 dim 0 : vector<16x32xf32>, i32 -> vector<16x32xf32>
    %109 = tpu.iota {dimensions = array<i32: 0>} : vector<16x32xi32>
    %c2_i32_59 = arith.constant 2 : i32
    %110 = vector.broadcast %c2_i32_59 : i32 to vector<16x32xi32>
    %111 = arith.cmpi sge, %109, %110 : vector<16x32xi32>
    %cst_60 = arith.constant 0.000000e+00 : f32
    %112 = vector.broadcast %cst_60 : f32 to vector<16x32xf32>
    %113 = arith.select %111, %108, %112 : vector<16x32xi1>, vector<16x32xf32>
    %114 = vector.extract_strided_slice %70 {offsets = [1, 0, 0], sizes = [1, 32, 32], strides = [1, 1, 1]} : vector<3x32x32xf32> to vector<1x32x32xf32>
    %115 = vector.shape_cast %114 : vector<1x32x32xf32> to vector<32x32xf32>
    %cst_61 = arith.constant dense<0.000000e+00> : vector<16x32xf32>
    %116 = tpu.matmul %113, %115, %cst_61 {dimension_numbers = #tpu.dot_dimension_numbers<[1], [0], [0], [1], [0, 0, 1, 1], [], []>} : vector<16x32xf32>, vector<32x32xf32>, vector<16x32xf32> -> vector<16x32xf32>
    %117 = arith.addf %107, %116 : vector<16x32xf32>
    %118 = vector.extract_strided_slice %70 {offsets = [2, 0, 0], sizes = [1, 32, 32], strides = [1, 1, 1]} : vector<3x32x32xf32> to vector<1x32x32xf32>
    %119 = vector.shape_cast %118 : vector<1x32x32xf32> to vector<32x32xf32>
    %cst_62 = arith.constant dense<0.000000e+00> : vector<16x32xf32>
    %120 = tpu.matmul %98, %119, %cst_62 {dimension_numbers = #tpu.dot_dimension_numbers<[1], [0], [0], [1], [0, 0, 1, 1], [], []>} : vector<16x32xf32>, vector<32x32xf32>, vector<16x32xf32> -> vector<16x32xf32>
    %121 = arith.addf %117, %120 : vector<16x32xf32>
    %122 = vector.broadcast %71 : vector<1x32xf32> to vector<16x32xf32>
    %123 = arith.addf %121, %122 : vector<16x32xf32>
    %cst_63 = arith.constant 0.000000e+00 : f32
    %124 = vector.broadcast %cst_63 : f32 to vector<16x32xf32>
    %125 = arith.maximumf %123, %124 : vector<16x32xf32>
    %c0_64 = arith.constant 0 : index
    %c0_65 = arith.constant 0 : index
    %126 = vector.load %arg12[%c0_64, %c0_65] : memref<16x32xf32, #tpu.memory_space<vmem>>, vector<16x32xf32>
    %c0_66 = arith.constant 0 : index
    %c0_67 = arith.constant 0 : index
    %127 = vector.load %arg13[%c0_66, %c0_67] : memref<1x32xf32, #tpu.memory_space<vmem>>, vector<1x32xf32>
    %cst_68 = arith.constant dense<0.000000e+00> : vector<16x32xf32>
    %128 = tpu.matmul %67, %126, %cst_68 {dimension_numbers = #tpu.dot_dimension_numbers<[1], [0], [0], [1], [0, 0, 1, 1], [], []>} : vector<16x16xf32>, vector<16x32xf32>, vector<16x32xf32> -> vector<16x32xf32>
    %129 = vector.broadcast %127 : vector<1x32xf32> to vector<16x32xf32>
    %130 = arith.addf %128, %129 : vector<16x32xf32>
    %131 = arith.addf %125, %130 : vector<16x32xf32>
    %cst_69 = arith.constant 0.000000e+00 : f32
    %132 = vector.broadcast %cst_69 : f32 to vector<16x32xf32>
    %133 = arith.maximumf %131, %132 : vector<16x32xf32>
    %c0_70 = arith.constant 0 : index
    %c0_71 = arith.constant 0 : index
    %c0_72 = arith.constant 0 : index
    %134 = vector.load %arg14[%c0_70, %c0_71, %c0_72] : memref<1x16x32xf32, #tpu.memory_space<vmem>>, vector<1x16x32xf32>
    %135 = vector.shape_cast %134 : vector<1x16x32xf32> to vector<16x32xf32>
    %136 = vector.shape_cast %133 : vector<16x32xf32> to vector<1x16x32xf32>
    tpu.vector_store %arg14[%c0_70, %c0_71, %c0_72], %136 {strides = array<i32>} : memref<1x16x32xf32, #tpu.memory_space<vmem>>, vector<1x16x32xf32>,
    return
  }
  func.func @transform_0(%arg0: i32) -> (i32, i32, i32) {
    %c0_i32 = arith.constant 0 : i32
    %c0_i32_0 = arith.constant 0 : i32
    %c0_i32_1 = arith.constant 0 : i32
    return %arg0, %c0_i32, %c0_i32_0 : i32, i32, i32
  }
  func.func @transform_1(%arg0: i32) -> (i32, i32, i32) {
    %c0_i32 = arith.constant 0 : i32
    %c0_i32_0 = arith.constant 0 : i32
    %c0_i32_1 = arith.constant 0 : i32
    %c0_i32_2 = arith.constant 0 : i32
    return %c0_i32, %c0_i32_0, %c0_i32_1 : i32, i32, i32
  }
  func.func @transform_2(%arg0: i32) -> (i32, i32) {
    %c0_i32 = arith.constant 0 : i32
    %c0_i32_0 = arith.constant 0 : i32
    %c0_i32_1 = arith.constant 0 : i32
    return %c0_i32, %c0_i32_0 : i32, i32
  }
  func.func @transform_3(%arg0: i32) -> (i32, i32, i32) {
    %c0_i32 = arith.constant 0 : i32
    %c0_i32_0 = arith.constant 0 : i32
    %c0_i32_1 = arith.constant 0 : i32
    %c0_i32_2 = arith.constant 0 : i32
    return %c0_i32, %c0_i32_0, %c0_i32_1 : i32, i32, i32
  }
  func.func @transform_4(%arg0: i32) -> (i32, i32) {
    %c0_i32 = arith.constant 0 : i32
    %c0_i32_0 = arith.constant 0 : i32
    %c0_i32_1 = arith.constant 0 : i32
    return %c0_i32, %c0_i32_0 : i32, i32
  }
  func.func @transform_5(%arg0: i32) -> (i32, i32) {
    %c0_i32 = arith.constant 0 : i32
    %c0_i32_0 = arith.constant 0 : i32
    %c0_i32_1 = arith.constant 0 : i32
    return %c0_i32, %c0_i32_0 : i32, i32
  }
  func.func @transform_6(%arg0: i32) -> (i32, i32) {
    %c0_i32 = arith.constant 0 : i32
    %c0_i32_0 = arith.constant 0 : i32
    %c0_i32_1 = arith.constant 0 : i32
    return %c0_i32, %c0_i32_0 : i32, i32
  }
  func.func @transform_7(%arg0: i32) -> (i32, i32, i32) {
    %c0_i32 = arith.constant 0 : i32
    %c0_i32_0 = arith.constant 0 : i32
    %c0_i32_1 = arith.constant 0 : i32
    %c0_i32_2 = arith.constant 0 : i32
    return %c0_i32, %c0_i32_0, %c0_i32_1 : i32, i32, i32
  }
  func.func @transform_8(%arg0: i32) -> (i32, i32) {
    %c0_i32 = arith.constant 0 : i32
    %c0_i32_0 = arith.constant 0 : i32
    %c0_i32_1 = arith.constant 0 : i32
    return %c0_i32, %c0_i32_0 : i32, i32
  }
  func.func @transform_9(%arg0: i32) -> (i32, i32, i32) {
    %c0_i32 = arith.constant 0 : i32
    %c0_i32_0 = arith.constant 0 : i32
    %c0_i32_1 = arith.constant 0 : i32
    %c0_i32_2 = arith.constant 0 : i32
    return %c0_i32, %c0_i32_0, %c0_i32_1 : i32, i32, i32
  }
  func.func @transform_10(%arg0: i32) -> (i32, i32) {
    %c0_i32 = arith.constant 0 : i32
    %c0_i32_0 = arith.constant 0 : i32
    %c0_i32_1 = arith.constant 0 : i32
    return %c0_i32, %c0_i32_0 : i32, i32
  }
  func.func @transform_11(%arg0: i32) -> (i32, i32) {
    %c0_i32 = arith.constant 0 : i32
    %c0_i32_0 = arith.constant 0 : i32
    %c0_i32_1 = arith.constant 0 : i32
    return %c0_i32, %c0_i32_0 : i32, i32
  }
  func.func @transform_12(%arg0: i32) -> (i32, i32) {
    %c0_i32 = arith.constant 0 : i32
    %c0_i32_0 = arith.constant 0 : i32
    %c0_i32_1 = arith.constant 0 : i32
    return %c0_i32, %c0_i32_0 : i32, i32
  }
  func.func @transform_13(%arg0: i32) -> (i32, i32, i32) {
    %c0_i32 = arith.constant 0 : i32
    %c0_i32_0 = arith.constant 0 : i32
    %c0_i32_1 = arith.constant 0 : i32
    return %arg0, %c0_i32, %c0_i32_0 : i32, i32, i32
  }
}

</mosaic_0001>

<llo_original>
// kernel: tpu_custom_call.1
$region0: #{tpu_custom_call.1}
  #allocation0 [shape = 'u32[]', space=smem, size = 0x4, offset = 0x4, fixed_abs, tag = 'smem constant byte address 0x4 - core index']
  #allocation1 [shape = 'u32[144,128]{1,0:T(1,128)}', space=vmem, size = 0x12000, scoped, tag = 'internal scratch']
  %s0 = inlined_call_operand.vmem [shape: f32[2,16,8], index: 0, kind: input, shape index: {}]
  %s1 = inlined_call_operand.hbm [shape: f32[3,8,16], index: 1, kind: input, shape index: {}]
  %s2 = inlined_call_operand.hbm [shape: f32[1,16], index: 2, kind: input, shape index: {}]
  %s3 = inlined_call_operand.vmem [shape: f32[3,16,16], index: 3, kind: input, shape index: {}]
  %s4 = inlined_call_operand.hbm [shape: f32[1,16], index: 4, kind: input, shape index: {}]
  %s5 = inlined_call_operand.hbm [shape: f32[8,16], index: 5, kind: input, shape index: {}]
  %s6 = inlined_call_operand.hbm [shape: f32[1,16], index: 6, kind: input, shape index: {}]
  %s7 = inlined_call_operand.hbm [shape: f32[3,16,32], index: 7, kind: input, shape index: {}]
  %s8 = inlined_call_operand.hbm [shape: f32[1,32], index: 8, kind: input, shape index: {}]
  %s9 = inlined_call_operand.hbm [shape: f32[3,32,32], index: 9, kind: input, shape index: {}]
  %s10 = inlined_call_operand.vmem [shape: f32[1,32], index: 10, kind: input, shape index: {}]
  %s11 = inlined_call_operand.vmem [shape: f32[16,32], index: 11, kind: input, shape index: {}]
  %s12 = inlined_call_operand.vmem [shape: f32[1,32], index: 12, kind: input, shape index: {}]
  %s13 = inlined_call_operand.hbm [shape: f32[2,16,32], index: 13, kind: output, shape index: {}]
  %s14 = sld [smem:[#allocation0]]
  $region117: #{tpu_custom_call.1} parent=0
    _
  %s16 = ssub.s32 1, %s14
  %s17 = scalar_select 0, %s16, %s14
  $region1: #{tpu_custom_call.1} parent=0
    #allocation2 [shape = 'u8[12288]{0}', space=vmem, size = 0x3000, scoped, tag = 'input window, operand 1, single buffered']
    #allocation3 [shape = 's32[2]{0}', space=sflag, size = 0x8, scoped, tag = 'scoped memory for tpu_custom_call.1']
    #allocation4 [shape = 's32[2]{0}', space=sflag, size = 0x8, scoped, tag = 'scoped memory for tpu_custom_call.1']
    #allocation5 [shape = 'u8[512]{0}', space=vmem, size = 0x400, scoped, tag = 'input window, operand 2, single buffered']
    #allocation6 [shape = 's32[1]{0}', space=sflag, size = 0x4, scoped, tag = 'scoped memory for tpu_custom_call.1']
    #allocation7 [shape = 'u8[512]{0}', space=vmem, size = 0x400, scoped, tag = 'input window, operand 4, single buffered']
    #allocation8 [shape = 'u8[4096]{0}', space=vmem, size = 0x1000, scoped, tag = 'input window, operand 5, single buffered']
    #allocation9 [shape = 's32[1]{0}', space=sflag, size = 0x4, scoped, tag = 'scoped memory for tpu_custom_call.1']
    #allocation10 [shape = 'u8[512]{0}', space=vmem, size = 0x400, scoped, tag = 'input window, operand 6, single buffered']
    #allocation11 [shape = 'u8[24576]{0}', space=vmem, size = 0x6000, scoped, tag = 'input window, operand 7, single buffered']
    #allocation12 [shape = 's32[1]{0}', space=sflag, size = 0x4, scoped, tag = 'scoped memory for tpu_custom_call.1']
    #allocation13 [shape = 'u8[512]{0}', space=vmem, size = 0x400, scoped, tag = 'input window, operand 8, single buffered']
    #allocation14 [shape = 'u8[49152]{0}', space=vmem, size = 0xc000, scoped, tag = 'input window, operand 9, single buffered']
    #allocation15 [shape = 's32[1]{0}', space=sflag, size = 0x4, scoped, tag = 'scoped memory for tpu_custom_call.1']
    #allocation16 [shape = 'u8[16384]{0}', space=vmem, size = 0x4000, scoped, tag = 'output window, operand 0']
    %18 = vsyncpa [#allocation3], 0
    %19 = vsyncpa [#allocation6], 0
    %20 = vsyncpa [#allocation9], 0
    %21 = vsyncpa [#allocation12], 0
    %22 = vsyncpa [#allocation15], 0
    %23 = vsyncpa [#allocation4], 0
    %s24 = scalar_lea.sflag [#allocation4], 1
    %25 = vsyncpa %s24, 0
    loop: start=0, step=1, limit=4
    $region2: #{tpu_custom_call.1} parent=1 // loop_pre_header
      _
    $region3: #{tpu_custom_call.1} parent=1 // loop_header
      %s27 = sphi 0, %s31
      %p28 = scmp.ge.s32.totalorder %s27, 4
      %s37 = sphi 0, %s39
      %s40 = sphi 0, %s37
      %s41 = sphi 0, %s40
      %s57 = sphi 0, %s41
      %s61 = sphi 0, %s61
      %s63 = sphi 0, %s61
      %s64 = sphi 0, %s63
      %s78 = sphi 0, %s64
      %s82 = sphi 0, %s82
      %s84 = sphi 0, %s82
      %s85 = sphi 0, %s84
      %s99 = sphi 0, %s85
      %s103 = sphi 0, %s103
      %s105 = sphi 0, %s103
      %s106 = sphi 0, %s105
      %s120 = sphi 0, %s106
      %s124 = sphi 0, %s124
      %s126 = sphi 0, %s124
      %s127 = sphi 0, %s126
      %s141 = sphi 0, %s127
      %s145 = sphi 0, %s145
      %s147 = sphi 0, %s145
      %s148 = sphi 0, %s147
      %s162 = sphi 0, %s148
      %s166 = sphi 0, %s166
      %s168 = sphi 0, %s166
      %s169 = sphi 0, %s168
      %s183 = sphi 0, %s169
      %s187 = sphi 0, %s187
      %s189 = sphi 0, %s187
      %s190 = sphi 0, %s189
      %s204 = sphi 0, %s190
      %s208 = sphi 0, %s208
      %s210 = sphi 0, %s208
      %s211 = sphi 0, %s210
      %s225 = sphi 0, %s211
      %s229 = sphi 0, %s229
      %s231 = sphi 0, %s229
      %s232 = sphi 0, %s231
      %s246 = sphi 0, %s232
      %s250 = sphi 0, %s250
      %s252 = sphi 0, %s250
      %s253 = sphi 0, %s252
      %s267 = sphi 0, %s253
      %s271 = sphi 0, %s271
      %s273 = sphi 0, %s271
      %s274 = sphi 0, %s273
      %s288 = sphi 0, %s274
      %s292 = sphi 0, %s292
      %s294 = sphi 0, %s292
      %s295 = sphi 0, %s294
      %s309 = sphi 0, %s295
      %s315 = sphi 0, %s317
      %s318 = sphi 0, %s315
      %s319 = sphi 0, %s318
      %s335 = sphi 0, %s319
    $region4: #{tpu_custom_call.1} parent=1 // loop_header_branch
      %30 = sbr.rel (%p28) target = $region8
    $region5: #{tpu_custom_call.1} parent=1 // loop_body
      %s32 = ssub.s32 %s27, 1
      %s33 = ssub.s32 %s27, 2
      %s34 = sadd.s32 %s27, 1
      %s35 = ssub.s32 %s27, %s34
      %p36 = scmp.eq.s32.totalorder %s35, 0
      %s38 = sadd.s32 %s37, 1
      %s39 = scalar_select %p36, %s37, %s38
      %p42 = pneg %p36
      %p43 = scmp.eq.s32.totalorder %s27, 1
      %p44 = por %p42, %p43
      %p45 = scmp.ne.s32.totalorder %s37, %s40
      %p46 = scmp.eq.s32.totalorder %s27, 0
      %p47 = por %p45, %p46
      %p48 = scmp.ne.s32.totalorder %s37, %s40
      %p49 = scmp.eq.s32.totalorder %s32, 1
      %p50 = por %p48, %p49
      %p51 = scmp.ne.s32.totalorder %s40, %s41
      %p52 = scmp.eq.s32.totalorder %s32, 0
      %p53 = por %p51, %p52
      %p54 = scmp.ne.s32.totalorder %s40, %s41
      %p55 = scmp.eq.s32.totalorder %s33, 1
      %p56 = por %p54, %p55
      %p58 = scmp.ne.s32.totalorder %s41, %s57
      %p59 = scmp.eq.s32.totalorder %s33, 0
      %p60 = por %p58, %p59
      %s62 = sadd.s32 %s61, 1
      %p65 = scmp.eq.s32.totalorder %s27, 1
      %p66 = scmp.ne.s32.totalorder %s61, %s63
      %p67 = scmp.eq.s32.totalorder %s27, 0
      %p68 = por %p66, %p67
      %p69 = scmp.ne.s32.totalorder %s61, %s63
      %p70 = scmp.eq.s32.totalorder %s32, 1
      %p71 = por %p69, %p70
      %p72 = scmp.ne.s32.totalorder %s63, %s64
      %p73 = scmp.eq.s32.totalorder %s32, 0
      %p74 = por %p72, %p73
      %p75 = scmp.ne.s32.totalorder %s63, %s64
      %p76 = scmp.eq.s32.totalorder %s33, 1
      %p77 = por %p75, %p76
      %p79 = scmp.ne.s32.totalorder %s64, %s78
      %p80 = scmp.eq.s32.totalorder %s33, 0
      %p81 = por %p79, %p80
      %s83 = sadd.s32 %s82, 1
      %p86 = scmp.eq.s32.totalorder %s27, 1
      %p87 = scmp.ne.s32.totalorder %s82, %s84
      %p88 = scmp.eq.s32.totalorder %s27, 0
      %p89 = por %p87, %p88
      %p90 = scmp.ne.s32.totalorder %s82, %s84
      %p91 = scmp.eq.s32.totalorder %s32, 1
      %p92 = por %p90, %p91
      %p93 = scmp.ne.s32.totalorder %s84, %s85
      %p94 = scmp.eq.s32.totalorder %s32, 0
      %p95 = por %p93, %p94
      %p96 = scmp.ne.s32.totalorder %s84, %s85
      %p97 = scmp.eq.s32.totalorder %s33, 1
      %p98 = por %p96, %p97
      %p100 = scmp.ne.s32.totalorder %s85, %s99
      %p101 = scmp.eq.s32.totalorder %s33, 0
      %p102 = por %p100, %p101
      %s104 = sadd.s32 %s103, 1
      %p107 = scmp.eq.s32.totalorder %s27, 1
      %p108 = scmp.ne.s32.totalorder %s103, %s105
      %p109 = scmp.eq.s32.totalorder %s27, 0
      %p110 = por %p108, %p109
      %p111 = scmp.ne.s32.totalorder %s103, %s105
      %p112 = scmp.eq.s32.totalorder %s32, 1
      %p113 = por %p111, %p112
      %p114 = scmp.ne.s32.totalorder %s105, %s106
      %p115 = scmp.eq.s32.totalorder %s32, 0
      %p116 = por %p114, %p115
      %p117 = scmp.ne.s32.totalorder %s105, %s106
      %p118 = scmp.eq.s32.totalorder %s33, 1
      %p119 = por %p117, %p118
      %p121 = scmp.ne.s32.totalorder %s106, %s120
      %p122 = scmp.eq.s32.totalorder %s33, 0
      %p123 = por %p121, %p122
      %s125 = sadd.s32 %s124, 1
      %p128 = scmp.eq.s32.totalorder %s27, 1
      %p129 = scmp.ne.s32.totalorder %s124, %s126
      %p130 = scmp.eq.s32.totalorder %s27, 0
      %p131 = por %p129, %p130
      %p132 = scmp.ne.s32.totalorder %s124, %s126
      %p133 = scmp.eq.s32.totalorder %s32, 1
      %p134 = por %p132, %p133
      %p135 = scmp.ne.s32.totalorder %s126, %s127
      %p136 = scmp.eq.s32.totalorder %s32, 0
      %p137 = por %p135, %p136
      %p138 = scmp.ne.s32.totalorder %s126, %s127
      %p139 = scmp.eq.s32.totalorder %s33, 1
      %p140 = por %p138, %p139
      %p142 = scmp.ne.s32.totalorder %s127, %s141
      %p143 = scmp.eq.s32.totalorder %s33, 0
      %p144 = por %p142, %p143
      %s146 = sadd.s32 %s145, 1
      %p149 = scmp.eq.s32.totalorder %s27, 1
      %p150 = scmp.ne.s32.totalorder %s145, %s147
      %p151 = scmp.eq.s32.totalorder %s27, 0
      %p152 = por %p150, %p151
      %p153 = scmp.ne.s32.totalorder %s145, %s147
      %p154 = scmp.eq.s32.totalorder %s32, 1
      %p155 = por %p153, %p154
      %p156 = scmp.ne.s32.totalorder %s147, %s148
      %p157 = scmp.eq.s32.totalorder %s32, 0
      %p158 = por %p156, %p157
      %p159 = scmp.ne.s32.totalorder %s147, %s148
      %p160 = scmp.eq.s32.totalorder %s33, 1
      %p161 = por %p159, %p160
      %p163 = scmp.ne.s32.totalorder %s148, %s162
      %p164 = scmp.eq.s32.totalorder %s33, 0
      %p165 = por %p163, %p164
      %s167 = sadd.s32 %s166, 1
      %p170 = scmp.eq.s32.totalorder %s27, 1
      %p171 = scmp.ne.s32.totalorder %s166, %s168
      %p172 = scmp.eq.s32.totalorder %s27, 0
      %p173 = por %p171, %p172
      %p174 = scmp.ne.s32.totalorder %s166, %s168
      %p175 = scmp.eq.s32.totalorder %s32, 1
      %p176 = por %p174, %p175
      %p177 = scmp.ne.s32.totalorder %s168, %s169
      %p178 = scmp.eq.s32.totalorder %s32, 0
      %p179 = por %p177, %p178
      %p180 = scmp.ne.s32.totalorder %s168, %s169
      %p181 = scmp.eq.s32.totalorder %s33, 1
      %p182 = por %p180, %p181
      %p184 = scmp.ne.s32.totalorder %s169, %s183
      %p185 = scmp.eq.s32.totalorder %s33, 0
      %p186 = por %p184, %p185
      %s188 = sadd.s32 %s187, 1
      %p191 = scmp.eq.s32.totalorder %s27, 1
      %p192 = scmp.ne.s32.totalorder %s187, %s189
      %p193 = scmp.eq.s32.totalorder %s27, 0
      %p194 = por %p192, %p193
      %p195 = scmp.ne.s32.totalorder %s187, %s189
      %p196 = scmp.eq.s32.totalorder %s32, 1
      %p197 = por %p195, %p196
      %p198 = scmp.ne.s32.totalorder %s189, %s190
      %p199 = scmp.eq.s32.totalorder %s32, 0
      %p200 = por %p198, %p199
      %p201 = scmp.ne.s32.totalorder %s189, %s190
      %p202 = scmp.eq.s32.totalorder %s33, 1
      %p203 = por %p201, %p202
      %p205 = scmp.ne.s32.totalorder %s190, %s204
      %p206 = scmp.eq.s32.totalorder %s33, 0
      %p207 = por %p205, %p206
      %s209 = sadd.s32 %s208, 1
      %p212 = scmp.eq.s32.totalorder %s27, 1
      %p213 = scmp.ne.s32.totalorder %s208, %s210
      %p214 = scmp.eq.s32.totalorder %s27, 0
      %p215 = por %p213, %p214
      %p216 = scmp.ne.s32.totalorder %s208, %s210
      %p217 = scmp.eq.s32.totalorder %s32, 1
      %p218 = por %p216, %p217
      %p219 = scmp.ne.s32.totalorder %s210, %s211
      %p220 = scmp.eq.s32.totalorder %s32, 0
      %p221 = por %p219, %p220
      %p222 = scmp.ne.s32.totalorder %s210, %s211
      %p223 = scmp.eq.s32.totalorder %s33, 1
      %p224 = por %p222, %p223
      %p226 = scmp.ne.s32.totalorder %s211, %s225
      %p227 = scmp.eq.s32.totalorder %s33, 0
      %p228 = por %p226, %p227
      %s230 = sadd.s32 %s229, 1
      %p233 = scmp.eq.s32.totalorder %s27, 1
      %p234 = scmp.ne.s32.totalorder %s229, %s231
      %p235 = scmp.eq.s32.totalorder %s27, 0
      %p236 = por %p234, %p235
      %p237 = scmp.ne.s32.totalorder %s229, %s231
      %p238 = scmp.eq.s32.totalorder %s32, 1
      %p239 = por %p237, %p238
      %p240 = scmp.ne.s32.totalorder %s231, %s232
      %p241 = scmp.eq.s32.totalorder %s32, 0
      %p242 = por %p240, %p241
      %p243 = scmp.ne.s32.totalorder %s231, %s232
      %p244 = scmp.eq.s32.totalorder %s33, 1
      %p245 = por %p243, %p244
      %p247 = scmp.ne.s32.totalorder %s232, %s246
      %p248 = scmp.eq.s32.totalorder %s33, 0
      %p249 = por %p247, %p248
      %s251 = sadd.s32 %s250, 1
      %p254 = scmp.eq.s32.totalorder %s27, 1
      %p255 = scmp.ne.s32.totalorder %s250, %s252
      %p256 = scmp.eq.s32.totalorder %s27, 0
      %p257 = por %p255, %p256
      %p258 = scmp.ne.s32.totalorder %s250, %s252
      %p259 = scmp.eq.s32.totalorder %s32, 1
      %p260 = por %p258, %p259
      %p261 = scmp.ne.s32.totalorder %s252, %s253
      %p262 = scmp.eq.s32.totalorder %s32, 0
      %p263 = por %p261, %p262
      %p264 = scmp.ne.s32.totalorder %s252, %s253
      %p265 = scmp.eq.s32.totalorder %s33, 1
      %p266 = por %p264, %p265
      %p268 = scmp.ne.s32.totalorder %s253, %s267
      %p269 = scmp.eq.s32.totalorder %s33, 0
      %p270 = por %p268, %p269
      %s272 = sadd.s32 %s271, 1
      %p275 = scmp.eq.s32.totalorder %s27, 1
      %p276 = scmp.ne.s32.totalorder %s271, %s273
      %p277 = scmp.eq.s32.totalorder %s27, 0
      %p278 = por %p276, %p277
      %p279 = scmp.ne.s32.totalorder %s271, %s273
      %p280 = scmp.eq.s32.totalorder %s32, 1
      %p281 = por %p279, %p280
      %p282 = scmp.ne.s32.totalorder %s273, %s274
      %p283 = scmp.eq.s32.totalorder %s32, 0
      %p284 = por %p282, %p283
      %p285 = scmp.ne.s32.totalorder %s273, %s274
      %p286 = scmp.eq.s32.totalorder %s33, 1
      %p287 = por %p285, %p286
      %p289 = scmp.ne.s32.totalorder %s274, %s288
      %p290 = scmp.eq.s32.totalorder %s33, 0
      %p291 = por %p289, %p290
      %s293 = sadd.s32 %s292, 1
      %p296 = scmp.eq.s32.totalorder %s27, 1
      %p297 = scmp.ne.s32.totalorder %s292, %s294
      %p298 = scmp.eq.s32.totalorder %s27, 0
      %p299 = por %p297, %p298
      %p300 = scmp.ne.s32.totalorder %s292, %s294
      %p301 = scmp.eq.s32.totalorder %s32, 1
      %p302 = por %p300, %p301
      %p303 = scmp.ne.s32.totalorder %s294, %s295
      %p304 = scmp.eq.s32.totalorder %s32, 0
      %p305 = por %p303, %p304
      %p306 = scmp.ne.s32.totalorder %s294, %s295
      %p307 = scmp.eq.s32.totalorder %s33, 1
      %p308 = por %p306, %p307
      %p310 = scmp.ne.s32.totalorder %s295, %s309
      %p311 = scmp.eq.s32.totalorder %s33, 0
      %p312 = por %p310, %p311
      %s313 = ssub.s32 %s27, %s34
      %p314 = scmp.eq.s32.totalorder %s313, 0
      %s316 = sadd.s32 %s315, 1
      %s317 = scalar_select %p314, %s315, %s316
      %p320 = pneg %p314
      %p321 = scmp.eq.s32.totalorder %s27, 1
      %p322 = por %p320, %p321
      %p323 = scmp.ne.s32.totalorder %s315, %s318
      %p324 = scmp.eq.s32.totalorder %s27, 0
      %p325 = por %p323, %p324
      %p326 = scmp.ne.s32.totalorder %s315, %s318
      %p327 = scmp.eq.s32.totalorder %s32, 1
      %p328 = por %p326, %p327
      %p329 = scmp.ne.s32.totalorder %s318, %s319
      %p330 = scmp.eq.s32.totalorder %s32, 0
      %p331 = por %p329, %p330
      %p332 = scmp.ne.s32.totalorder %s318, %s319
      %p333 = scmp.eq.s32.totalorder %s33, 1
      %p334 = por %p332, %p333
      %p336 = scmp.ne.s32.totalorder %s319, %s335
      %p337 = scmp.eq.s32.totalorder %s33, 0
      %p338 = por %p336, %p337
      %p339 = scmp.le.s32.totalorder 1, %s27
      %p340 = scmp.lt.s32.totalorder %s27, 3
      %p341 = pnand %p339, %p340
      %p342 = pneg %p341
      // Predicated region
      $region9: #{tpu_custom_call.1} parent=5 // pred_check
        _
      $region10: #{tpu_custom_call.1} parent=5 // pred_check_branch
        %344 = sbr.rel (%p341) target = $region12
      $region11: #{tpu_custom_call.1} parent=5 // pred_region
        %s345 = ssub.s32 %s27, 1
        // Predicated region
        $region13: #{tpu_custom_call.1} parent=11 // pred_check
          %p346 = pneg %p74
        $region14: #{tpu_custom_call.1} parent=11 // pred_check_branch
          %348 = sbr.rel (%p346) target = $region16
        $region15: #{tpu_custom_call.1} parent=11 // pred_region
          %s350 = ssub.s32 384, 384
          %351 = vsyncadd [#allocation3], %s350
          %s352 = sshll.u32 [#allocation2], 4
          %s353 = int_to_ptr.vmem [resolvable:$true] %s352
          %358 = dma.hbm_to_vmem [thread:$0]  %s1, 384, %s353, [#allocation3], 128, 128, 8
        $region16: #{tpu_custom_call.1} parent=11 // pred_fallthru
          _
        // Predicated region
        $region17: #{tpu_custom_call.1} parent=11 // pred_check
          %p359 = pneg %p95
        $region18: #{tpu_custom_call.1} parent=11 // pred_check_branch
          %361 = sbr.rel (%p359) target = $region20
        $region19: #{tpu_custom_call.1} parent=11 // pred_region
          %s363 = ssub.s32 16, 16
          %364 = vsyncadd [#allocation6], %s363
          %s366 = sshll.u32 [#allocation5], 4
          %s367 = int_to_ptr.vmem [resolvable:$true] %s366
          %369 = dma.hbm_to_vmem [thread:$0]  %s2, 16, %s367, [#allocation6]
        $region20: #{tpu_custom_call.1} parent=11 // pred_fallthru
          _
        // Predicated region
        $region21: #{tpu_custom_call.1} parent=11 // pred_check
          %p370 = pneg %p116
        $region22: #{tpu_custom_call.1} parent=11 // pred_check_branch
          %372 = sbr.rel (%p370) target = $region24
        $region23: #{tpu_custom_call.1} parent=11 // pred_region
          _
        $region24: #{tpu_custom_call.1} parent=11 // pred_fallthru
          _
        // Predicated region
        $region25: #{tpu_custom_call.1} parent=11 // pred_check
          %p373 = pneg %p137
        $region26: #{tpu_custom_call.1} parent=11 // pred_check_branch
          %375 = sbr.rel (%p373) target = $region28
        $region27: #{tpu_custom_call.1} parent=11 // pred_region
          %s377 = ssub.s32 16, 16
          %378 = vsyncadd [#allocation6], %s377
          %s380 = sshll.u32 [#allocation7], 4
          %s381 = int_to_ptr.vmem [resolvable:$true] %s380
          %383 = dma.hbm_to_vmem [thread:$0]  %s4, 16, %s381, [#allocation6]
        $region28: #{tpu_custom_call.1} parent=11 // pred_fallthru
          _
        // Predicated region
        $region29: #{tpu_custom_call.1} parent=11 // pred_check
          %p384 = pneg %p158
        $region30: #{tpu_custom_call.1} parent=11 // pred_check_branch
          %386 = sbr.rel (%p384) target = $region32
        $region31: #{tpu_custom_call.1} parent=11 // pred_region
          %s388 = ssub.s32 128, 128
          %389 = vsyncadd [#allocation9], %s388
          %s391 = sshll.u32 [#allocation8], 4
          %s392 = int_to_ptr.vmem [resolvable:$true] %s391
          %394 = dma.hbm_to_vmem [thread:$0]  %s5, 128, %s392, [#allocation9]
        $region32: #{tpu_custom_call.1} parent=11 // pred_fallthru
          _
        // Predicated region
        $region33: #{tpu_custom_call.1} parent=11 // pred_check
          %p395 = pneg %p179
        $region34: #{tpu_custom_call.1} parent=11 // pred_check_branch
          %397 = sbr.rel (%p395) target = $region36
        $region35: #{tpu_custom_call.1} parent=11 // pred_region
          %s399 = ssub.s32 16, 16
          %400 = vsyncadd [#allocation9], %s399
          %s402 = sshll.u32 [#allocation10], 4
          %s403 = int_to_ptr.vmem [resolvable:$true] %s402
          %405 = dma.hbm_to_vmem [thread:$0]  %s6, 16, %s403, [#allocation9]
        $region36: #{tpu_custom_call.1} parent=11 // pred_fallthru
          _
        // Predicated region
        $region37: #{tpu_custom_call.1} parent=11 // pred_check
          %p406 = pneg %p200
        $region38: #{tpu_custom_call.1} parent=11 // pred_check_branch
          %408 = sbr.rel (%p406) target = $region40
        $region39: #{tpu_custom_call.1} parent=11 // pred_region
          %s410 = ssub.s32 768, 768
          %411 = vsyncadd [#allocation12], %s410
          %s412 = sshll.u32 [#allocation11], 4
          %s413 = int_to_ptr.vmem [resolvable:$true] %s412
          %418 = dma.hbm_to_vmem [thread:$0]  %s7, 768, %s413, [#allocation12], 128, 128, 8
        $region40: #{tpu_custom_call.1} parent=11 // pred_fallthru
          _
        // Predicated region
        $region41: #{tpu_custom_call.1} parent=11 // pred_check
          %p419 = pneg %p221
        $region42: #{tpu_custom_call.1} parent=11 // pred_check_branch
          %421 = sbr.rel (%p419) target = $region44
        $region43: #{tpu_custom_call.1} parent=11 // pred_region
          %s423 = ssub.s32 16, 16
          %424 = vsyncadd [#allocation12], %s423
          %s426 = sshll.u32 [#allocation13], 4
          %s427 = int_to_ptr.vmem [resolvable:$true] %s426
          %429 = dma.hbm_to_vmem [thread:$0]  %s8, 16, %s427, [#allocation12]
        $region44: #{tpu_custom_call.1} parent=11 // pred_fallthru
          _
        // Predicated region
        $region45: #{tpu_custom_call.1} parent=11 // pred_check
          %p430 = pneg %p242
        $region46: #{tpu_custom_call.1} parent=11 // pred_check_branch
          %432 = sbr.rel (%p430) target = $region48
        $region47: #{tpu_custom_call.1} parent=11 // pred_region
          %s434 = ssub.s32 1536, 1536
          %435 = vsyncadd [#allocation15], %s434
          %s436 = sshll.u32 [#allocation14], 4
          %s437 = int_to_ptr.vmem [resolvable:$true] %s436
          %442 = dma.hbm_to_vmem [thread:$0]  %s9, 1536, %s437, [#allocation15], 128, 128, 8
        $region48: #{tpu_custom_call.1} parent=11 // pred_fallthru
          _
        // Predicated region
        $region49: #{tpu_custom_call.1} parent=11 // pred_check
          %p443 = pneg %p263
        $region50: #{tpu_custom_call.1} parent=11 // pred_check_branch
          %445 = sbr.rel (%p443) target = $region52
        $region51: #{tpu_custom_call.1} parent=11 // pred_region
          _
        $region52: #{tpu_custom_call.1} parent=11 // pred_fallthru
          _
        // Predicated region
        $region53: #{tpu_custom_call.1} parent=11 // pred_check
          %p446 = pneg %p284
        $region54: #{tpu_custom_call.1} parent=11 // pred_check_branch
          %448 = sbr.rel (%p446) target = $region56
        $region55: #{tpu_custom_call.1} parent=11 // pred_region
          _
        $region56: #{tpu_custom_call.1} parent=11 // pred_fallthru
          _
        // Predicated region
        $region57: #{tpu_custom_call.1} parent=11 // pred_check
          %p449 = pneg %p305
        $region58: #{tpu_custom_call.1} parent=11 // pred_check_branch
          %451 = sbr.rel (%p449) target = $region60
        $region59: #{tpu_custom_call.1} parent=11 // pred_region
          _
        $region60: #{tpu_custom_call.1} parent=11 // pred_fallthru
          _
      $region12: #{tpu_custom_call.1} parent=5 // pred_fallthru
        _
      %p452 = scmp.lt.s32.totalorder %s27, 2
      // Predicated region
      $region61: #{tpu_custom_call.1} parent=5 // pred_check
        %p453 = pneg %p452
      $region62: #{tpu_custom_call.1} parent=5 // pred_check_branch
        %455 = sbr.rel (%p453) target = $region64
      $region63: #{tpu_custom_call.1} parent=5 // pred_region
        // Predicated region
        $region65: #{tpu_custom_call.1} parent=63 // pred_check
          %p456 = pneg %p47
        $region66: #{tpu_custom_call.1} parent=63 // pred_check_branch
          %458 = sbr.rel (%p456) target = $region68
        $region67: #{tpu_custom_call.1} parent=63 // pred_region
          %p459 = scmp.lt.s32.totalorder %s27, 1
          %s460 = scalar_select %p459, %s27, 1
          %s461 = smul.addr %s460, 2
          %s462 = smul.addr %s461, 8
          %s463 = scalar_lea.vmem %s0, %s462
        $region68: #{tpu_custom_call.1} parent=63 // pred_fallthru
          _
      $region64: #{tpu_custom_call.1} parent=5 // pred_fallthru
        _
      %p464 = scmp.le.s32.totalorder 1, %s27
      %p465 = scmp.lt.s32.totalorder %s27, 3
      %p466 = pnand %p464, %p465
      %p467 = pneg %p466
      // Predicated region
      $region69: #{tpu_custom_call.1} parent=5 // pred_check
        _
      $region70: #{tpu_custom_call.1} parent=5 // pred_check_branch
        %469 = sbr.rel (%p466) target = $region72
      $region71: #{tpu_custom_call.1} parent=5 // pred_region
        %s470 = ssub.s32 %s27, 1
        // Predicated region
        $region73: #{tpu_custom_call.1} parent=71 // pred_check
          %p471 = pneg %p74
        $region74: #{tpu_custom_call.1} parent=71 // pred_check_branch
          %473 = sbr.rel (%p471) target = $region76
        $region75: #{tpu_custom_call.1} parent=71 // pred_region
          %474 = dma.done [#allocation3], 384
        $region76: #{tpu_custom_call.1} parent=71 // pred_fallthru
          _
        // Predicated region
        $region77: #{tpu_custom_call.1} parent=71 // pred_check
          %p475 = pneg %p95
        $region78: #{tpu_custom_call.1} parent=71 // pred_check_branch
          %477 = sbr.rel (%p475) target = $region80
        $region79: #{tpu_custom_call.1} parent=71 // pred_region
          %478 = dma.done [#allocation6], 16
        $region80: #{tpu_custom_call.1} parent=71 // pred_fallthru
          _
        // Predicated region
        $region81: #{tpu_custom_call.1} parent=71 // pred_check
          %p479 = pneg %p137
        $region82: #{tpu_custom_call.1} parent=71 // pred_check_branch
          %481 = sbr.rel (%p479) target = $region84
        $region83: #{tpu_custom_call.1} parent=71 // pred_region
          %482 = dma.done [#allocation6], 16
        $region84: #{tpu_custom_call.1} parent=71 // pred_fallthru
          _
        // Predicated region
        $region85: #{tpu_custom_call.1} parent=71 // pred_check
          %p483 = pneg %p158
        $region86: #{tpu_custom_call.1} parent=71 // pred_check_branch
          %485 = sbr.rel (%p483) target = $region88
        $region87: #{tpu_custom_call.1} parent=71 // pred_region
          %486 = dma.done [#allocation9], 128
        $region88: #{tpu_custom_call.1} parent=71 // pred_fallthru
          _
        // Predicated region
        $region89: #{tpu_custom_call.1} parent=71 // pred_check
          %p487 = pneg %p179
        $region90: #{tpu_custom_call.1} parent=71 // pred_check_branch
          %489 = sbr.rel (%p487) target = $region92
        $region91: #{tpu_custom_call.1} parent=71 // pred_region
          %490 = dma.done [#allocation9], 16
        $region92: #{tpu_custom_call.1} parent=71 // pred_fallthru
          _
        // Predicated region
        $region93: #{tpu_custom_call.1} parent=71 // pred_check
          %p491 = pneg %p200
        $region94: #{tpu_custom_call.1} parent=71 // pred_check_branch
          %493 = sbr.rel (%p491) target = $region96
        $region95: #{tpu_custom_call.1} parent=71 // pred_region
          %494 = dma.done [#allocation12], 768
        $region96: #{tpu_custom_call.1} parent=71 // pred_fallthru
          _
        // Predicated region
        $region97: #{tpu_custom_call.1} parent=71 // pred_check
          %p495 = pneg %p221
        $region98: #{tpu_custom_call.1} parent=71 // pred_check_branch
          %497 = sbr.rel (%p495) target = $region100
        $region99: #{tpu_custom_call.1} parent=71 // pred_region
          %498 = dma.done [#allocation12], 16
        $region100: #{tpu_custom_call.1} parent=71 // pred_fallthru
          _
        // Predicated region
        $region101: #{tpu_custom_call.1} parent=71 // pred_check
          %p499 = pneg %p242
        $region102: #{tpu_custom_call.1} parent=71 // pred_check_branch
          %501 = sbr.rel (%p499) target = $region104
        $region103: #{tpu_custom_call.1} parent=71 // pred_region
          %502 = dma.done [#allocation15], 1536
        $region104: #{tpu_custom_call.1} parent=71 // pred_fallthru
          _
        %p503 = scmp.lt.s32.totalorder %s32, 1
        %s504 = scalar_select %p503, %s32, 1
        %s505 = smul.addr %s504, 2
        %s506 = smul.addr %s505, 8
        %s507 = scalar_lea.vmem %s0, %s506
        %p508 = pneg %p53
        %p509 = pneg %p50
        %p510 = pneg %p74
        %p511 = pneg %p71
        %p512 = pneg %p95
        %p513 = pneg %p92
        %p514 = pneg %p116
        %p515 = pneg %p113
        %p516 = pneg %p137
        %p517 = pneg %p134
        %p518 = pneg %p158
        %p519 = pneg %p155
        %p520 = pneg %p179
        %p521 = pneg %p176
        %p522 = pneg %p200
        %p523 = pneg %p197
        %p524 = pneg %p221
        %p525 = pneg %p218
        %p526 = pneg %p242
        %p527 = pneg %p239
        %p528 = pneg %p263
        %p529 = pneg %p260
        %p530 = pneg %p284
        %p531 = pneg %p281
        %p532 = pneg %p305
        %p533 = pneg %p302
        %p534 = pneg %p331
        %p535 = pneg %p328
        %s536 = sand.u32 %s318, 1
        %s537 = scalar_lea.sflag [#allocation4], %s536
        %s538 = sand.u32 %s318, 1
        %s539 = smul.addr %s538, 16
        %s540 = scalar_lea.vmem [#allocation16], %s539
        %p541 = scmp.lt.s32.totalorder %s32, 1
        %s542 = scalar_select %p541, %s32, 1
        %s543 = smul.addr %s542, 2
        %s544 = smul.addr %s543, 8
        %s545 = scalar_lea.vmem %s0, %s544
        %v546 = vld [vmem:[%s545] sm:$0xff]
        %v547 = vld [vmem:[%s545 + $0x8] sm:$0xff]
        %v548 = vld [vmem:[#allocation2] sm:$0xff]
        %v549 = vld [vmem:[#allocation2 + $0x8] sm:$0xff]
        %v550 = vld [vmem:[#allocation2 + $0x10] sm:$0xff]
        %v551 = vld [vmem:[#allocation5] sm:$0x1]
        %v552 = vld [vmem:[%s3] sm:$0xff]
        %v553 = vld [vmem:[%s3 + $0x8] sm:$0xff]
        %v554 = vld [vmem:[%s3 + $0x10] sm:$0xff]
        %v555 = vld [vmem:[%s3 + $0x18] sm:$0xff]
        %v556 = vld [vmem:[%s3 + $0x20] sm:$0xff]
        %v557 = vld [vmem:[%s3 + $0x28] sm:$0xff]
        %v558 = vld [vmem:[#allocation7] sm:$0x1]
        %v559 = vrot.slane %v546, 6
        %v560 = vrot.slane %v547, 6
        %v561 = vlaneseq
        %v562 = vshrl.u32 %v561, 7
        %vm563 = vcmp.lt.s32.totalorder %v562, 2
        %v564 = vsel %vm563, %v559, %v560
        %v565 = vsel %vm563, %v560, %v559
        %v566 = vadd.s32 %v562, 8
        %vm567 = vcmp.ge.s32.totalorder %v562, 2
        %vm568 = vcmp.ge.s32.totalorder %v566, 2
        %v569 = vsel %vm567, %v565, 0.0
        %v570 = vsel %vm568, %v564, 0.0
        %v571 = vrot.slane %v546, 7
        %v572 = vrot.slane %v547, 7
        %vm573 = vcmp.lt.s32.totalorder %v562, 1
        %v574 = vsel %vm573, %v571, %v572
        %v575 = vsel %vm573, %v572, %v571
        %vm576 = vcmp.ge.s32.totalorder %v562, 1
        %vm577 = vcmp.ge.s32.totalorder %v566, 1
        %v578 = vsel %vm576, %v575, 0.0
        %v579 = vsel %vm577, %v574, 0.0
        %vm580 = vcmask 64512
        %v582 = vsel %vm580, %v578, 0
        %v585 = vsel %vm580, %v579, 0
        %587 = vmatprep.subr.mxu0 0.0
        %588 = vmatpush1.msra.mxu0 0.0
        %589 = vmatprep.subr.mxu0 0.0
        %590 = vmatpush1.msra.mxu0 0.0
        %591 = vmatprep.subr.mxu0 0.0
        %592 = vmatpush1.msra.mxu0 0.0
        %593 = vmatprep.subr.mxu0 0.0
        %594 = vmatpush1.msra.mxu0 0.0
        %595 = vmatprep.subr.mxu0 0.0
        %596 = vmatpush1.msra.mxu0 0.0
        %597 = vmatprep.subr.mxu0 0.0
        %598 = vmatpush1.msra.mxu0 0.0
        %599 = vmatprep.subr.mxu0 0.0
        %600 = vmatpush1.msra.mxu0 0.0
        %601 = vmatprep.subr.mxu0 0.0
        %602 = vmatpush1.msra.mxu0 0.0
        %603 = vmatprep.subr.mxu0 0.0
        %604 = vmatpush1.msra.mxu0 0.0
        %605 = vmatprep.subr.mxu0 0.0
        %606 = vmatpush1.msra.mxu0 0.0
        %607 = vmatprep.subr.mxu0 0.0
        %608 = vmatpush1.msra.mxu0 0.0
        %609 = vmatprep.subr.mxu0 0.0
        %610 = vmatpush1.msra.mxu0 0.0
        %611 = vmatprep.subr.mxu0 0.0
        %612 = vmatpush1.msra.mxu0 0.0
        %613 = vmatprep.subr.mxu0 0.0
        %614 = vmatpush1.msra.mxu0 0.0
        %615 = vmatprep.subr.mxu0 0.0
        %616 = vmatpush1.msra.mxu0 0.0
        %617 = vmatprep.subr.mxu0 0.0
        %618 = vmatpush1.msra.mxu0 %v549
        %619 = vmatprep.subr.mxu0 0.0
        %620 = vmatpush2.msra.mxu0 0.0
        %621 = vmatprep.subr.mxu0 0.0
        %622 = vmatpush2.msra.mxu0 0.0
        %623 = vmatprep.subr.mxu0 0.0
        %624 = vmatpush2.msra.mxu0 0.0
        %625 = vmatprep.subr.mxu0 0.0
        %626 = vmatpush2.msra.mxu0 0.0
        %627 = vmatprep.subr.mxu0 0.0
        %628 = vmatpush2.msra.mxu0 0.0
        %629 = vmatprep.subr.mxu0 0.0
        %630 = vmatpush2.msra.mxu0 0.0
        %631 = vmatprep.subr.mxu0 0.0
        %632 = vmatpush2.msra.mxu0 0.0
        %633 = vmatprep.subr.mxu0 0.0
        %634 = vmatpush2.msra.mxu0 0.0
        %635 = vmatprep.subr.mxu0 0.0
        %636 = vmatpush2.msra.mxu0 0.0
        %637 = vmatprep.subr.mxu0 0.0
        %638 = vmatpush2.msra.mxu0 0.0
        %639 = vmatprep.subr.mxu0 0.0
        %640 = vmatpush2.msra.mxu0 0.0
        %641 = vmatprep.subr.mxu0 0.0
        %642 = vmatpush2.msra.mxu0 0.0
        %643 = vmatprep.subr.mxu0 0.0
        %644 = vmatpush2.msra.mxu0 0.0
        %645 = vmatprep.subr.mxu0 0.0
        %646 = vmatpush2.msra.mxu0 0.0
        %647 = vmatprep.subr.mxu0 0.0
        %648 = vmatpush2.msra.mxu0 0.0
        %649 = vmatprep.subr.mxu0 0.0
        %650 = vmatpush2.msra.mxu0 0.0
        %651 = vmatprep.mubr.f32.mxu0 0.0
        %652 = vmatmul.mubr.f32.gmra.mxu0 %v582
        %v653 = vpop.f32.mrf.mxu0
        %v654 = vadd.f32 0.0, %v653
        %v655 = vpop.f32.mrf.mxu0
        %656 = vmatprep.mubr.f32.mxu0 0.0
        %657 = vmatmul.mubr.f32.gmra.mxu0 %v585
        %v658 = vpop.f32.mrf.mxu0
        %v659 = vadd.f32 0.0, %v658
        %v660 = vpop.f32.mrf.mxu0
        %661 = vdwg.mxu0
        %v663 = vsel %vm580, %v569, 0
        %v666 = vsel %vm580, %v570, 0
        %668 = vmatprep.subr.mxu0 0.0
        %669 = vmatpush1.msra.mxu0 0.0
        %670 = vmatprep.subr.mxu0 0.0
        %671 = vmatpush1.msra.mxu0 0.0
        %672 = vmatprep.subr.mxu0 0.0
        %673 = vmatpush1.msra.mxu0 0.0
        %674 = vmatprep.subr.mxu0 0.0
        %675 = vmatpush1.msra.mxu0 0.0
        %676 = vmatprep.subr.mxu0 0.0
        %677 = vmatpush1.msra.mxu0 0.0
        %678 = vmatprep.subr.mxu0 0.0
        %679 = vmatpush1.msra.mxu0 0.0
        %680 = vmatprep.subr.mxu0 0.0
        %681 = vmatpush1.msra.mxu0 0.0
        %682 = vmatprep.subr.mxu0 0.0
        %683 = vmatpush1.msra.mxu0 0.0
        %684 = vmatprep.subr.mxu0 0.0
        %685 = vmatpush1.msra.mxu0 0.0
        %686 = vmatprep.subr.mxu0 0.0
        %687 = vmatpush1.msra.mxu0 0.0
        %688 = vmatprep.subr.mxu0 0.0
        %689 = vmatpush1.msra.mxu0 0.0
        %690 = vmatprep.subr.mxu0 0.0
        %691 = vmatpush1.msra.mxu0 0.0
        %692 = vmatprep.subr.mxu0 0.0
        %693 = vmatpush1.msra.mxu0 0.0
        %694 = vmatprep.subr.mxu0 0.0
        %695 = vmatpush1.msra.mxu0 0.0
        %696 = vmatprep.subr.mxu0 0.0
        %697 = vmatpush1.msra.mxu0 0.0
        %698 = vmatprep.subr.mxu0 0.0
        %699 = vmatpush1.msra.mxu0 %v548
        %700 = vmatprep.subr.mxu0 0.0
        %701 = vmatpush2.msra.mxu0 0.0
        %702 = vmatprep.subr.mxu0 0.0
        %703 = vmatpush2.msra.mxu0 0.0
        %704 = vmatprep.subr.mxu0 0.0
        %705 = vmatpush2.msra.mxu0 0.0
        %706 = vmatprep.subr.mxu0 0.0
        %707 = vmatpush2.msra.mxu0 0.0
        %708 = vmatprep.subr.mxu0 0.0
        %709 = vmatpush2.msra.mxu0 0.0
        %710 = vmatprep.subr.mxu0 0.0
        %711 = vmatpush2.msra.mxu0 0.0
        %712 = vmatprep.subr.mxu0 0.0
        %713 = vmatpush2.msra.mxu0 0.0
        %714 = vmatprep.subr.mxu0 0.0
        %715 = vmatpush2.msra.mxu0 0.0
        %716 = vmatprep.subr.mxu0 0.0
        %717 = vmatpush2.msra.mxu0 0.0
        %718 = vmatprep.subr.mxu0 0.0
        %719 = vmatpush2.msra.mxu0 0.0
        %720 = vmatprep.subr.mxu0 0.0
        %721 = vmatpush2.msra.mxu0 0.0
        %722 = vmatprep.subr.mxu0 0.0
        %723 = vmatpush2.msra.mxu0 0.0
        %724 = vmatprep.subr.mxu0 0.0
        %725 = vmatpush2.msra.mxu0 0.0
        %726 = vmatprep.subr.mxu0 0.0
        %727 = vmatpush2.msra.mxu0 0.0
        %728 = vmatprep.subr.mxu0 0.0
        %729 = vmatpush2.msra.mxu0 0.0
        %730 = vmatprep.subr.mxu0 0.0
        %731 = vmatpush2.msra.mxu0 0.0
        %732 = vmatprep.mubr.f32.mxu0 0.0
        %733 = vmatmul.mubr.f32.gmra.mxu0 %v663
        %v734 = vpop.f32.mrf.mxu0
        %v735 = vadd.f32 %v654, %v734
        %v736 = vpop.f32.mrf.mxu0
        %737 = vmatprep.mubr.f32.mxu0 0.0
        %738 = vmatmul.mubr.f32.gmra.mxu0 %v666
        %v739 = vpop.f32.mrf.mxu0
        %v740 = vadd.f32 %v659, %v739
        %v741 = vpop.f32.mrf.mxu0
        %742 = vdwg.mxu0
        %v744 = vsel %vm580, %v546, 0
        %v747 = vsel %vm580, %v547, 0
        %749 = vmatprep.subr.mxu0 0.0
        %750 = vmatpush1.msra.mxu0 0.0
        %751 = vmatprep.subr.mxu0 0.0
        %752 = vmatpush1.msra.mxu0 0.0
        %753 = vmatprep.subr.mxu0 0.0
        %754 = vmatpush1.msra.mxu0 0.0
        %755 = vmatprep.subr.mxu0 0.0
        %756 = vmatpush1.msra.mxu0 0.0
        %757 = vmatprep.subr.mxu0 0.0
        %758 = vmatpush1.msra.mxu0 0.0
        %759 = vmatprep.subr.mxu0 0.0
        %760 = vmatpush1.msra.mxu0 0.0
        %761 = vmatprep.subr.mxu0 0.0
        %762 = vmatpush1.msra.mxu0 0.0
        %763 = vmatprep.subr.mxu0 0.0
        %764 = vmatpush1.msra.mxu0 0.0
        %765 = vmatprep.subr.mxu0 0.0
        %766 = vmatpush1.msra.mxu0 0.0
        %767 = vmatprep.subr.mxu0 0.0
        %768 = vmatpush1.msra.mxu0 0.0
        %769 = vmatprep.subr.mxu0 0.0
        %770 = vmatpush1.msra.mxu0 0.0
        %771 = vmatprep.subr.mxu0 0.0
        %772 = vmatpush1.msra.mxu0 0.0
        %773 = vmatprep.subr.mxu0 0.0
        %774 = vmatpush1.msra.mxu0 0.0
        %775 = vmatprep.subr.mxu0 0.0
        %776 = vmatpush1.msra.mxu0 0.0
        %777 = vmatprep.subr.mxu0 0.0
        %778 = vmatpush1.msra.mxu0 0.0
        %779 = vmatprep.subr.mxu0 0.0
        %780 = vmatpush1.msra.mxu0 %v550
        %781 = vmatprep.subr.mxu0 0.0
        %782 = vmatpush2.msra.mxu0 0.0
        %783 = vmatprep.subr.mxu0 0.0
        %784 = vmatpush2.msra.mxu0 0.0
        %785 = vmatprep.subr.mxu0 0.0
        %786 = vmatpush2.msra.mxu0 0.0
        %787 = vmatprep.subr.mxu0 0.0
        %788 = vmatpush2.msra.mxu0 0.0
        %789 = vmatprep.subr.mxu0 0.0
        %790 = vmatpush2.msra.mxu0 0.0
        %791 = vmatprep.subr.mxu0 0.0
        %792 = vmatpush2.msra.mxu0 0.0
        %793 = vmatprep.subr.mxu0 0.0
        %794 = vmatpush2.msra.mxu0 0.0
        %795 = vmatprep.subr.mxu0 0.0
        %796 = vmatpush2.msra.mxu0 0.0
        %797 = vmatprep.subr.mxu0 0.0
        %798 = vmatpush2.msra.mxu0 0.0
        %799 = vmatprep.subr.mxu0 0.0
        %800 = vmatpush2.msra.mxu0 0.0
        %801 = vmatprep.subr.mxu0 0.0
        %802 = vmatpush2.msra.mxu0 0.0
        %803 = vmatprep.subr.mxu0 0.0
        %804 = vmatpush2.msra.mxu0 0.0
        %805 = vmatprep.subr.mxu0 0.0
        %806 = vmatpush2.msra.mxu0 0.0
        %807 = vmatprep.subr.mxu0 0.0
        %808 = vmatpush2.msra.mxu0 0.0
        %809 = vmatprep.subr.mxu0 0.0
        %810 = vmatpush2.msra.mxu0 0.0
        %811 = vmatprep.subr.mxu0 0.0
        %812 = vmatpush2.msra.mxu0 0.0
        %813 = vmatprep.mubr.f32.mxu0 0.0
        %814 = vmatmul.mubr.f32.gmra.mxu0 %v744
        %v815 = vpop.f32.mrf.mxu0
        %v816 = vadd.f32 0.0, %v815
        %v817 = vpop.f32.mrf.mxu0
        %818 = vmatprep.mubr.f32.mxu0 0.0
        %819 = vmatmul.mubr.f32.gmra.mxu0 %v747
        %v820 = vpop.f32.mrf.mxu0
        %v821 = vadd.f32 0.0, %v820
        %v822 = vpop.f32.mrf.mxu0
        %823 = vdwg.mxu0
        %v824 = vadd.f32 %v735, %v816
        %v825 = vadd.f32 %v740, %v821
        %v827 = vlaneseq
        %v828 = vshrl.u32 %v827, 7
        %v829 = vsub.s32 0, %v828
        %v830 = vrot.slane %v551, %v829
        %v832 = vadd.f32 %v824, %v830
        %v833 = vadd.f32 %v825, %v830
        %v834 = vmax.f32 %v832, 0.0
        %v835 = vmax.f32 %v833, 0.0
        %v836 = vrot.slane %v834, 6
        %v837 = vrot.slane %v835, 6
        %v838 = vsel %vm563, %v836, %v837
        %v839 = vsel %vm563, %v837, %v836
        %v840 = vsel %vm567, %v839, 0.0
        %v841 = vsel %vm568, %v838, 0.0
        %v842 = vrot.slane %v834, 7
        %v843 = vrot.slane %v835, 7
        %v844 = vsel %vm573, %v842, %v843
        %v845 = vsel %vm573, %v843, %v842
        %v846 = vsel %vm576, %v845, 0.0
        %v847 = vsel %vm577, %v844, 0.0
        %vm848 = vcmask 130048
        %v850 = vsel %vm848, %v846, 0
        %v853 = vsel %vm848, %v847, 0
        %855 = vmatprep.subr.mxu0 0.0
        %856 = vmatpush1.msra.mxu0 0.0
        %857 = vmatprep.subr.mxu0 0.0
        %858 = vmatpush1.msra.mxu0 0.0
        %859 = vmatprep.subr.mxu0 0.0
        %860 = vmatpush1.msra.mxu0 0.0
        %861 = vmatprep.subr.mxu0 0.0
        %862 = vmatpush1.msra.mxu0 0.0
        %863 = vmatprep.subr.mxu0 0.0
        %864 = vmatpush1.msra.mxu0 0.0
        %865 = vmatprep.subr.mxu0 0.0
        %866 = vmatpush1.msra.mxu0 0.0
        %867 = vmatprep.subr.mxu0 0.0
        %868 = vmatpush1.msra.mxu0 0.0
        %869 = vmatprep.subr.mxu0 0.0
        %870 = vmatpush1.msra.mxu0 0.0
        %871 = vmatprep.subr.mxu0 0.0
        %872 = vmatpush1.msra.mxu0 0.0
        %873 = vmatprep.subr.mxu0 0.0
        %874 = vmatpush1.msra.mxu0 0.0
        %875 = vmatprep.subr.mxu0 0.0
        %876 = vmatpush1.msra.mxu0 0.0
        %877 = vmatprep.subr.mxu0 0.0
        %878 = vmatpush1.msra.mxu0 0.0
        %879 = vmatprep.subr.mxu0 0.0
        %880 = vmatpush1.msra.mxu0 0.0
        %881 = vmatprep.subr.mxu0 0.0
        %882 = vmatpush1.msra.mxu0 0.0
        %883 = vmatprep.subr.mxu0 0.0
        %884 = vmatpush1.msra.mxu0 %v555
        %885 = vmatprep.subr.mxu0 0.0
        %886 = vmatpush1.msra.mxu0 %v554
        %887 = vmatprep.subr.mxu0 0.0
        %888 = vmatpush2.msra.mxu0 0.0
        %889 = vmatprep.subr.mxu0 0.0
        %890 = vmatpush2.msra.mxu0 0.0
        %891 = vmatprep.subr.mxu0 0.0
        %892 = vmatpush2.msra.mxu0 0.0
        %893 = vmatprep.subr.mxu0 0.0
        %894 = vmatpush2.msra.mxu0 0.0
        %895 = vmatprep.subr.mxu0 0.0
        %896 = vmatpush2.msra.mxu0 0.0
        %897 = vmatprep.subr.mxu0 0.0
        %898 = vmatpush2.msra.mxu0 0.0
        %899 = vmatprep.subr.mxu0 0.0
        %900 = vmatpush2.msra.mxu0 0.0
        %901 = vmatprep.subr.mxu0 0.0
        %902 = vmatpush2.msra.mxu0 0.0
        %903 = vmatprep.subr.mxu0 0.0
        %904 = vmatpush2.msra.mxu0 0.0
        %905 = vmatprep.subr.mxu0 0.0
        %906 = vmatpush2.msra.mxu0 0.0
        %907 = vmatprep.subr.mxu0 0.0
        %908 = vmatpush2.msra.mxu0 0.0
        %909 = vmatprep.subr.mxu0 0.0
        %910 = vmatpush2.msra.mxu0 0.0
        %911 = vmatprep.subr.mxu0 0.0
        %912 = vmatpush2.msra.mxu0 0.0
        %913 = vmatprep.subr.mxu0 0.0
        %914 = vmatpush2.msra.mxu0 0.0
        %915 = vmatprep.subr.mxu0 0.0
        %916 = vmatpush2.msra.mxu0 0.0
        %917 = vmatprep.subr.mxu0 0.0
        %918 = vmatpush2.msra.mxu0 0.0
        %919 = vmatprep.mubr.f32.mxu0 0.0
        %920 = vmatmul.mubr.f32.gmra.mxu0 %v850
        %v921 = vpop.f32.mrf.mxu0
        %v922 = vadd.f32 0.0, %v921
        %v923 = vpop.f32.mrf.mxu0
        %924 = vmatprep.mubr.f32.mxu0 0.0
        %925 = vmatmul.mubr.f32.gmra.mxu0 %v853
        %v926 = vpop.f32.mrf.mxu0
        %v927 = vadd.f32 0.0, %v926
        %v928 = vpop.f32.mrf.mxu0
        %929 = vdwg.mxu0
        %v931 = vsel %vm848, %v840, 0
        %v934 = vsel %vm848, %v841, 0
        %936 = vmatprep.subr.mxu0 0.0
        %937 = vmatpush1.msra.mxu0 0.0
        %938 = vmatprep.subr.mxu0 0.0
        %939 = vmatpush1.msra.mxu0 0.0
        %940 = vmatprep.subr.mxu0 0.0
        %941 = vmatpush1.msra.mxu0 0.0
        %942 = vmatprep.subr.mxu0 0.0
        %943 = vmatpush1.msra.mxu0 0.0
        %944 = vmatprep.subr.mxu0 0.0
        %945 = vmatpush1.msra.mxu0 0.0
        %946 = vmatprep.subr.mxu0 0.0
        %947 = vmatpush1.msra.mxu0 0.0
        %948 = vmatprep.subr.mxu0 0.0
        %949 = vmatpush1.msra.mxu0 0.0
        %950 = vmatprep.subr.mxu0 0.0
        %951 = vmatpush1.msra.mxu0 0.0
        %952 = vmatprep.subr.mxu0 0.0
        %953 = vmatpush1.msra.mxu0 0.0
        %954 = vmatprep.subr.mxu0 0.0
        %955 = vmatpush1.msra.mxu0 0.0
        %956 = vmatprep.subr.mxu0 0.0
        %957 = vmatpush1.msra.mxu0 0.0
        %958 = vmatprep.subr.mxu0 0.0
        %959 = vmatpush1.msra.mxu0 0.0
        %960 = vmatprep.subr.mxu0 0.0
        %961 = vmatpush1.msra.mxu0 0.0
        %962 = vmatprep.subr.mxu0 0.0
        %963 = vmatpush1.msra.mxu0 0.0
        %964 = vmatprep.subr.mxu0 0.0
        %965 = vmatpush1.msra.mxu0 %v553
        %966 = vmatprep.subr.mxu0 0.0
        %967 = vmatpush1.msra.mxu0 %v552
        %968 = vmatprep.subr.mxu0 0.0
        %969 = vmatpush2.msra.mxu0 0.0
        %970 = vmatprep.subr.mxu0 0.0
        %971 = vmatpush2.msra.mxu0 0.0
        %972 = vmatprep.subr.mxu0 0.0
        %973 = vmatpush2.msra.mxu0 0.0
        %974 = vmatprep.subr.mxu0 0.0
        %975 = vmatpush2.msra.mxu0 0.0
        %976 = vmatprep.subr.mxu0 0.0
        %977 = vmatpush2.msra.mxu0 0.0
        %978 = vmatprep.subr.mxu0 0.0
        %979 = vmatpush2.msra.mxu0 0.0
        %980 = vmatprep.subr.mxu0 0.0
        %981 = vmatpush2.msra.mxu0 0.0
        %982 = vmatprep.subr.mxu0 0.0
        %983 = vmatpush2.msra.mxu0 0.0
        %984 = vmatprep.subr.mxu0 0.0
        %985 = vmatpush2.msra.mxu0 0.0
        %986 = vmatprep.subr.mxu0 0.0
        %987 = vmatpush2.msra.mxu0 0.0
        %988 = vmatprep.subr.mxu0 0.0
        %989 = vmatpush2.msra.mxu0 0.0
        %990 = vmatprep.subr.mxu0 0.0
        %991 = vmatpush2.msra.mxu0 0.0
        %992 = vmatprep.subr.mxu0 0.0
        %993 = vmatpush2.msra.mxu0 0.0
        %994 = vmatprep.subr.mxu0 0.0
        %995 = vmatpush2.msra.mxu0 0.0
        %996 = vmatprep.subr.mxu0 0.0
        %997 = vmatpush2.msra.mxu0 0.0
        %998 = vmatprep.subr.mxu0 0.0
        %999 = vmatpush2.msra.mxu0 0.0
        %1000 = vmatprep.mubr.f32.mxu0 0.0
        %1001 = vmatmul.mubr.f32.gmra.mxu0 %v931
        %v1002 = vpop.f32.mrf.mxu0
        %v1003 = vadd.f32 %v922, %v1002
        %v1004 = vpop.f32.mrf.mxu0
        %1005 = vmatprep.mubr.f32.mxu0 0.0
        %1006 = vmatmul.mubr.f32.gmra.mxu0 %v934
        %v1007 = vpop.f32.mrf.mxu0
        %v1008 = vadd.f32 %v927, %v1007
        %v1009 = vpop.f32.mrf.mxu0
        %1010 = vdwg.mxu0
        %v1012 = vsel %vm848, %v834, 0
        %v1015 = vsel %vm848, %v835, 0
        %1017 = vmatprep.subr.mxu0 0.0
        %1018 = vmatpush1.msra.mxu0 0.0
        %1019 = vmatprep.subr.mxu0 0.0
        %1020 = vmatpush1.msra.mxu0 0.0
        %1021 = vmatprep.subr.mxu0 0.0
        %1022 = vmatpush1.msra.mxu0 0.0
        %1023 = vmatprep.subr.mxu0 0.0
        %1024 = vmatpush1.msra.mxu0 0.0
        %1025 = vmatprep.subr.mxu0 0.0
        %1026 = vmatpush1.msra.mxu0 0.0
        %1027 = vmatprep.subr.mxu0 0.0
        %1028 = vmatpush1.msra.mxu0 0.0
        %1029 = vmatprep.subr.mxu0 0.0
        %1030 = vmatpush1.msra.mxu0 0.0
        %1031 = vmatprep.subr.mxu0 0.0
        %1032 = vmatpush1.msra.mxu0 0.0
        %1033 = vmatprep.subr.mxu0 0.0
        %1034 = vmatpush1.msra.mxu0 0.0
        %1035 = vmatprep.subr.mxu0 0.0
        %1036 = vmatpush1.msra.mxu0 0.0
        %1037 = vmatprep.subr.mxu0 0.0
        %1038 = vmatpush1.msra.mxu0 0.0
        %1039 = vmatprep.subr.mxu0 0.0
        %1040 = vmatpush1.msra.mxu0 0.0
        %1041 = vmatprep.subr.mxu0 0.0
        %1042 = vmatpush1.msra.mxu0 0.0
        %1043 = vmatprep.subr.mxu0 0.0
        %1044 = vmatpush1.msra.mxu0 0.0
        %1045 = vmatprep.subr.mxu0 0.0
        %1046 = vmatpush1.msra.mxu0 %v557
        %1047 = vmatprep.subr.mxu0 0.0
        %1048 = vmatpush1.msra.mxu0 %v556
        %1049 = vmatprep.subr.mxu0 0.0
        %1050 = vmatpush2.msra.mxu0 0.0
        %1051 = vmatprep.subr.mxu0 0.0
        %1052 = vmatpush2.msra.mxu0 0.0
        %1053 = vmatprep.subr.mxu0 0.0
        %1054 = vmatpush2.msra.mxu0 0.0
        %1055 = vmatprep.subr.mxu0 0.0
        %1056 = vmatpush2.msra.mxu0 0.0
        %1057 = vmatprep.subr.mxu0 0.0
        %1058 = vmatpush2.msra.mxu0 0.0
        %1059 = vmatprep.subr.mxu0 0.0
        %1060 = vmatpush2.msra.mxu0 0.0
        %1061 = vmatprep.subr.mxu0 0.0
        %1062 = vmatpush2.msra.mxu0 0.0
        %1063 = vmatprep.subr.mxu0 0.0
        %1064 = vmatpush2.msra.mxu0 0.0
        %1065 = vmatprep.subr.mxu0 0.0
        %1066 = vmatpush2.msra.mxu0 0.0
        %1067 = vmatprep.subr.mxu0 0.0
        %1068 = vmatpush2.msra.mxu0 0.0
        %1069 = vmatprep.subr.mxu0 0.0
        %1070 = vmatpush2.msra.mxu0 0.0
        %1071 = vmatprep.subr.mxu0 0.0
        %1072 = vmatpush2.msra.mxu0 0.0
        %1073 = vmatprep.subr.mxu0 0.0
        %1074 = vmatpush2.msra.mxu0 0.0
        %1075 = vmatprep.subr.mxu0 0.0
        %1076 = vmatpush2.msra.mxu0 0.0
        %1077 = vmatprep.subr.mxu0 0.0
        %1078 = vmatpush2.msra.mxu0 0.0
        %1079 = vmatprep.subr.mxu0 0.0
        %1080 = vmatpush2.msra.mxu0 0.0
        %1081 = vmatprep.mubr.f32.mxu0 0.0
        %1082 = vmatmul.mubr.f32.gmra.mxu0 %v1012
        %v1083 = vpop.f32.mrf.mxu0
        %v1084 = vadd.f32 0.0, %v1083
        %v1085 = vpop.f32.mrf.mxu0
        %1086 = vmatprep.mubr.f32.mxu0 0.0
        %1087 = vmatmul.mubr.f32.gmra.mxu0 %v1015
        %v1088 = vpop.f32.mrf.mxu0
        %v1089 = vadd.f32 0.0, %v1088
        %v1090 = vpop.f32.mrf.mxu0
        %1091 = vdwg.mxu0
        %v1092 = vadd.f32 %v1003, %v1084
        %v1093 = vadd.f32 %v1008, %v1089
        %v1095 = vlaneseq
        %v1096 = vshrl.u32 %v1095, 7
        %v1097 = vsub.s32 0, %v1096
        %v1098 = vrot.slane %v558, %v1097
        %v1100 = vadd.f32 %v1092, %v1098
        %v1101 = vadd.f32 %v1093, %v1098
        %v1102 = vmax.f32 %v1100, 0.0
        %v1103 = vmax.f32 %v1101, 0.0
        %v1104 = vld [vmem:[#allocation8] sm:$0xff]
        %v1105 = vld [vmem:[#allocation10] sm:$0x1]
        %v1107 = vlaneseq
        %v1108 = vshrl.u32 %v1107, 7
        %v1109 = vsub.s32 0, %v1108
        %v1110 = vrot.slane %v1105, %v1109
        %1112 = vmatprep.subr.mxu0 0.0
        %1113 = vmatpush1.msra.mxu0 0.0
        %1114 = vmatprep.subr.mxu0 0.0
        %1115 = vmatpush1.msra.mxu0 0.0
        %1116 = vmatprep.subr.mxu0 0.0
        %1117 = vmatpush1.msra.mxu0 0.0
        %1118 = vmatprep.subr.mxu0 0.0
        %1119 = vmatpush1.msra.mxu0 0.0
        %1120 = vmatprep.subr.mxu0 0.0
        %1121 = vmatpush1.msra.mxu0 0.0
        %1122 = vmatprep.subr.mxu0 0.0
        %1123 = vmatpush1.msra.mxu0 0.0
        %1124 = vmatprep.subr.mxu0 0.0
        %1125 = vmatpush1.msra.mxu0 0.0
        %1126 = vmatprep.subr.mxu0 0.0
        %1127 = vmatpush1.msra.mxu0 0.0
        %1128 = vmatprep.subr.mxu0 0.0
        %1129 = vmatpush1.msra.mxu0 0.0
        %1130 = vmatprep.subr.mxu0 0.0
        %1131 = vmatpush1.msra.mxu0 0.0
        %1132 = vmatprep.subr.mxu0 0.0
        %1133 = vmatpush1.msra.mxu0 0.0
        %1134 = vmatprep.subr.mxu0 0.0
        %1135 = vmatpush1.msra.mxu0 0.0
        %1136 = vmatprep.subr.mxu0 0.0
        %1137 = vmatpush1.msra.mxu0 0.0
        %1138 = vmatprep.subr.mxu0 0.0
        %1139 = vmatpush1.msra.mxu0 0.0
        %1140 = vmatprep.subr.mxu0 0.0
        %1141 = vmatpush1.msra.mxu0 0.0
        %1142 = vmatprep.subr.mxu0 0.0
        %1143 = vmatpush1.msra.mxu0 %v1104
        %1144 = vmatprep.subr.mxu0 0.0
        %1145 = vmatpush2.msra.mxu0 0.0
        %1146 = vmatprep.subr.mxu0 0.0
        %1147 = vmatpush2.msra.mxu0 0.0
        %1148 = vmatprep.subr.mxu0 0.0
        %1149 = vmatpush2.msra.mxu0 0.0
        %1150 = vmatprep.subr.mxu0 0.0
        %1151 = vmatpush2.msra.mxu0 0.0
        %1152 = vmatprep.subr.mxu0 0.0
        %1153 = vmatpush2.msra.mxu0 0.0
        %1154 = vmatprep.subr.mxu0 0.0
        %1155 = vmatpush2.msra.mxu0 0.0
        %1156 = vmatprep.subr.mxu0 0.0
        %1157 = vmatpush2.msra.mxu0 0.0
        %1158 = vmatprep.subr.mxu0 0.0
        %1159 = vmatpush2.msra.mxu0 0.0
        %1160 = vmatprep.subr.mxu0 0.0
        %1161 = vmatpush2.msra.mxu0 0.0
        %1162 = vmatprep.subr.mxu0 0.0
        %1163 = vmatpush2.msra.mxu0 0.0
        %1164 = vmatprep.subr.mxu0 0.0
        %1165 = vmatpush2.msra.mxu0 0.0
        %1166 = vmatprep.subr.mxu0 0.0
        %1167 = vmatpush2.msra.mxu0 0.0
        %1168 = vmatprep.subr.mxu0 0.0
        %1169 = vmatpush2.msra.mxu0 0.0
        %1170 = vmatprep.subr.mxu0 0.0
        %1171 = vmatpush2.msra.mxu0 0.0
        %1172 = vmatprep.subr.mxu0 0.0
        %1173 = vmatpush2.msra.mxu0 0.0
        %1174 = vmatprep.subr.mxu0 0.0
        %1175 = vmatpush2.msra.mxu0 0.0
        %1176 = vmatprep.mubr.f32.mxu0 0.0
        %1177 = vmatmul.mubr.f32.gmra.mxu0 %v744
        %v1178 = vpop.f32.mrf.mxu0
        %v1179 = vadd.f32 %v1110, %v1178
        %v1180 = vpop.f32.mrf.mxu0
        %1181 = vmatprep.mubr.f32.mxu0 0.0
        %1182 = vmatmul.mubr.f32.gmra.mxu0 %v747
        %v1183 = vpop.f32.mrf.mxu0
        %v1184 = vadd.f32 %v1110, %v1183
        %v1185 = vpop.f32.mrf.mxu0
        %1186 = vdwg.mxu0
        %v1187 = vadd.f32 %v1102, %v1179
        %v1188 = vadd.f32 %v1103, %v1184
        %v1189 = vmax.f32 %v1187, 0.0
        %v1190 = vmax.f32 %v1188, 0.0
        %v1191 = vld [vmem:[#allocation11] sm:$0xff]
        %v1192 = vld [vmem:[#allocation11 + $0x8] sm:$0xff]
        %v1193 = vld [vmem:[#allocation11 + $0x10] sm:$0xff]
        %v1194 = vld [vmem:[#allocation11 + $0x18] sm:$0xff]
        %v1195 = vld [vmem:[#allocation11 + $0x20] sm:$0xff]
        %v1196 = vld [vmem:[#allocation11 + $0x28] sm:$0xff]
        %v1197 = vld [vmem:[#allocation13] sm:$0x1]
        %v1198 = vld [vmem:[#allocation14] sm:$0xff]
        %v1199 = vld [vmem:[#allocation14 + $0x8] sm:$0xff]
        %v1200 = vld [vmem:[#allocation14 + $0x10] sm:$0xff]
        %v1201 = vld [vmem:[#allocation14 + $0x18] sm:$0xff]
        %v1202 = vld [vmem:[#allocation14 + $0x20] sm:$0xff]
        %v1203 = vld [vmem:[#allocation14 + $0x28] sm:$0xff]
        %v1204 = vld [vmem:[#allocation14 + $0x30] sm:$0xff]
        %v1205 = vld [vmem:[#allocation14 + $0x38] sm:$0xff]
        %v1206 = vld [vmem:[#allocation14 + $0x40] sm:$0xff]
        %v1207 = vld [vmem:[#allocation14 + $0x48] sm:$0xff]
        %v1208 = vld [vmem:[#allocation14 + $0x50] sm:$0xff]
        %v1209 = vld [vmem:[#allocation14 + $0x58] sm:$0xff]
        %v1210 = vld [vmem:[%s10] sm:$0x1]
        %v1211 = vrot.slane %v1189, 4
        %v1212 = vrot.slane %v1190, 4
        %vm1213 = vcmp.lt.s32.totalorder %v562, 4
        %v1214 = vsel %vm1213, %v1211, %v1212
        %v1215 = vsel %vm1213, %v1212, %v1211
        %vm1216 = vcmp.ge.s32.totalorder %v562, 4
        %vm1217 = vcmp.ge.s32.totalorder %v566, 4
        %v1218 = vsel %vm1216, %v1215, 0.0
        %v1219 = vsel %vm1217, %v1214, 0.0
        %v1220 = vrot.slane %v1189, 6
        %v1221 = vrot.slane %v1190, 6
        %v1222 = vsel %vm563, %v1220, %v1221
        %v1223 = vsel %vm563, %v1221, %v1220
        %v1224 = vsel %vm567, %v1223, 0.0
        %v1225 = vsel %vm568, %v1222, 0.0
        %v1227 = vsel %vm848, %v1224, 0
        %v1230 = vsel %vm848, %v1225, 0
        %1232 = vmatprep.subr.mxu0 0.0
        %1233 = vmatpush1.msra.mxu0 0.0
        %1234 = vmatprep.subr.mxu0 0.0
        %1235 = vmatpush1.msra.mxu0 0.0
        %1236 = vmatprep.subr.mxu0 0.0
        %1237 = vmatpush1.msra.mxu0 0.0
        %1238 = vmatprep.subr.mxu0 0.0
        %1239 = vmatpush1.msra.mxu0 0.0
        %1240 = vmatprep.subr.mxu0 0.0
        %1241 = vmatpush1.msra.mxu0 0.0
        %1242 = vmatprep.subr.mxu0 0.0
        %1243 = vmatpush1.msra.mxu0 0.0
        %1244 = vmatprep.subr.mxu0 0.0
        %1245 = vmatpush1.msra.mxu0 0.0
        %1246 = vmatprep.subr.mxu0 0.0
        %1247 = vmatpush1.msra.mxu0 0.0
        %1248 = vmatprep.subr.mxu0 0.0
        %1249 = vmatpush1.msra.mxu0 0.0
        %1250 = vmatprep.subr.mxu0 0.0
        %1251 = vmatpush1.msra.mxu0 0.0
        %1252 = vmatprep.subr.mxu0 0.0
        %1253 = vmatpush1.msra.mxu0 0.0
        %1254 = vmatprep.subr.mxu0 0.0
        %1255 = vmatpush1.msra.mxu0 0.0
        %1256 = vmatprep.subr.mxu0 0.0
        %1257 = vmatpush1.msra.mxu0 0.0
        %1258 = vmatprep.subr.mxu0 0.0
        %1259 = vmatpush1.msra.mxu0 0.0
        %1260 = vmatprep.subr.mxu0 0.0
        %1261 = vmatpush1.msra.mxu0 %v1194
        %1262 = vmatprep.subr.mxu0 0.0
        %1263 = vmatpush1.msra.mxu0 %v1193
        %1264 = vmatprep.subr.mxu0 0.0
        %1265 = vmatpush2.msra.mxu0 0.0
        %1266 = vmatprep.subr.mxu0 0.0
        %1267 = vmatpush2.msra.mxu0 0.0
        %1268 = vmatprep.subr.mxu0 0.0
        %1269 = vmatpush2.msra.mxu0 0.0
        %1270 = vmatprep.subr.mxu0 0.0
        %1271 = vmatpush2.msra.mxu0 0.0
        %1272 = vmatprep.subr.mxu0 0.0
        %1273 = vmatpush2.msra.mxu0 0.0
        %1274 = vmatprep.subr.mxu0 0.0
        %1275 = vmatpush2.msra.mxu0 0.0
        %1276 = vmatprep.subr.mxu0 0.0
        %1277 = vmatpush2.msra.mxu0 0.0
        %1278 = vmatprep.subr.mxu0 0.0
        %1279 = vmatpush2.msra.mxu0 0.0
        %1280 = vmatprep.subr.mxu0 0.0
        %1281 = vmatpush2.msra.mxu0 0.0
        %1282 = vmatprep.subr.mxu0 0.0
        %1283 = vmatpush2.msra.mxu0 0.0
        %1284 = vmatprep.subr.mxu0 0.0
        %1285 = vmatpush2.msra.mxu0 0.0
        %1286 = vmatprep.subr.mxu0 0.0
        %1287 = vmatpush2.msra.mxu0 0.0
        %1288 = vmatprep.subr.mxu0 0.0
        %1289 = vmatpush2.msra.mxu0 0.0
        %1290 = vmatprep.subr.mxu0 0.0
        %1291 = vmatpush2.msra.mxu0 0.0
        %1292 = vmatprep.subr.mxu0 0.0
        %1293 = vmatpush2.msra.mxu0 0.0
        %1294 = vmatprep.subr.mxu0 0.0
        %1295 = vmatpush2.msra.mxu0 0.0
        %1296 = vmatprep.mubr.f32.mxu0 0.0
        %1297 = vmatmul.mubr.f32.gmra.mxu0 %v1227
        %v1298 = vpop.f32.mrf.mxu0
        %v1299 = vadd.f32 0.0, %v1298
        %v1300 = vpop.f32.mrf.mxu0
        %1301 = vmatprep.mubr.f32.mxu0 0.0
        %1302 = vmatmul.mubr.f32.gmra.mxu0 %v1230
        %v1303 = vpop.f32.mrf.mxu0
        %v1304 = vadd.f32 0.0, %v1303
        %v1305 = vpop.f32.mrf.mxu0
        %1306 = vdwg.mxu0
        %v1308 = vsel %vm848, %v1218, 0
        %v1311 = vsel %vm848, %v1219, 0
        %1313 = vmatprep.subr.mxu0 0.0
        %1314 = vmatpush1.msra.mxu0 0.0
        %1315 = vmatprep.subr.mxu0 0.0
        %1316 = vmatpush1.msra.mxu0 0.0
        %1317 = vmatprep.subr.mxu0 0.0
        %1318 = vmatpush1.msra.mxu0 0.0
        %1319 = vmatprep.subr.mxu0 0.0
        %1320 = vmatpush1.msra.mxu0 0.0
        %1321 = vmatprep.subr.mxu0 0.0
        %1322 = vmatpush1.msra.mxu0 0.0
        %1323 = vmatprep.subr.mxu0 0.0
        %1324 = vmatpush1.msra.mxu0 0.0
        %1325 = vmatprep.subr.mxu0 0.0
        %1326 = vmatpush1.msra.mxu0 0.0
        %1327 = vmatprep.subr.mxu0 0.0
        %1328 = vmatpush1.msra.mxu0 0.0
        %1329 = vmatprep.subr.mxu0 0.0
        %1330 = vmatpush1.msra.mxu0 0.0
        %1331 = vmatprep.subr.mxu0 0.0
        %1332 = vmatpush1.msra.mxu0 0.0
        %1333 = vmatprep.subr.mxu0 0.0
        %1334 = vmatpush1.msra.mxu0 0.0
        %1335 = vmatprep.subr.mxu0 0.0
        %1336 = vmatpush1.msra.mxu0 0.0
        %1337 = vmatprep.subr.mxu0 0.0
        %1338 = vmatpush1.msra.mxu0 0.0
        %1339 = vmatprep.subr.mxu0 0.0
        %1340 = vmatpush1.msra.mxu0 0.0
        %1341 = vmatprep.subr.mxu0 0.0
        %1342 = vmatpush1.msra.mxu0 %v1192
        %1343 = vmatprep.subr.mxu0 0.0
        %1344 = vmatpush1.msra.mxu0 %v1191
        %1345 = vmatprep.subr.mxu0 0.0
        %1346 = vmatpush2.msra.mxu0 0.0
        %1347 = vmatprep.subr.mxu0 0.0
        %1348 = vmatpush2.msra.mxu0 0.0
        %1349 = vmatprep.subr.mxu0 0.0
        %1350 = vmatpush2.msra.mxu0 0.0
        %1351 = vmatprep.subr.mxu0 0.0
        %1352 = vmatpush2.msra.mxu0 0.0
        %1353 = vmatprep.subr.mxu0 0.0
        %1354 = vmatpush2.msra.mxu0 0.0
        %1355 = vmatprep.subr.mxu0 0.0
        %1356 = vmatpush2.msra.mxu0 0.0
        %1357 = vmatprep.subr.mxu0 0.0
        %1358 = vmatpush2.msra.mxu0 0.0
        %1359 = vmatprep.subr.mxu0 0.0
        %1360 = vmatpush2.msra.mxu0 0.0
        %1361 = vmatprep.subr.mxu0 0.0
        %1362 = vmatpush2.msra.mxu0 0.0
        %1363 = vmatprep.subr.mxu0 0.0
        %1364 = vmatpush2.msra.mxu0 0.0
        %1365 = vmatprep.subr.mxu0 0.0
        %1366 = vmatpush2.msra.mxu0 0.0
        %1367 = vmatprep.subr.mxu0 0.0
        %1368 = vmatpush2.msra.mxu0 0.0
        %1369 = vmatprep.subr.mxu0 0.0
        %1370 = vmatpush2.msra.mxu0 0.0
        %1371 = vmatprep.subr.mxu0 0.0
        %1372 = vmatpush2.msra.mxu0 0.0
        %1373 = vmatprep.subr.mxu0 0.0
        %1374 = vmatpush2.msra.mxu0 0.0
        %1375 = vmatprep.subr.mxu0 0.0
        %1376 = vmatpush2.msra.mxu0 0.0
        %1377 = vmatprep.mubr.f32.mxu0 0.0
        %1378 = vmatmul.mubr.f32.gmra.mxu0 %v1308
        %v1379 = vpop.f32.mrf.mxu0
        %v1380 = vadd.f32 %v1299, %v1379
        %v1381 = vpop.f32.mrf.mxu0
        %1382 = vmatprep.mubr.f32.mxu0 0.0
        %1383 = vmatmul.mubr.f32.gmra.mxu0 %v1311
        %v1384 = vpop.f32.mrf.mxu0
        %v1385 = vadd.f32 %v1304, %v1384
        %v1386 = vpop.f32.mrf.mxu0
        %1387 = vdwg.mxu0
        %v1389 = vsel %vm848, %v1189, 0
        %v1392 = vsel %vm848, %v1190, 0
        %1394 = vmatprep.subr.mxu0 0.0
        %1395 = vmatpush1.msra.mxu0 0.0
        %1396 = vmatprep.subr.mxu0 0.0
        %1397 = vmatpush1.msra.mxu0 0.0
        %1398 = vmatprep.subr.mxu0 0.0
        %1399 = vmatpush1.msra.mxu0 0.0
        %1400 = vmatprep.subr.mxu0 0.0
        %1401 = vmatpush1.msra.mxu0 0.0
        %1402 = vmatprep.subr.mxu0 0.0
        %1403 = vmatpush1.msra.mxu0 0.0
        %1404 = vmatprep.subr.mxu0 0.0
        %1405 = vmatpush1.msra.mxu0 0.0
        %1406 = vmatprep.subr.mxu0 0.0
        %1407 = vmatpush1.msra.mxu0 0.0
        %1408 = vmatprep.subr.mxu0 0.0
        %1409 = vmatpush1.msra.mxu0 0.0
        %1410 = vmatprep.subr.mxu0 0.0
        %1411 = vmatpush1.msra.mxu0 0.0
        %1412 = vmatprep.subr.mxu0 0.0
        %1413 = vmatpush1.msra.mxu0 0.0
        %1414 = vmatprep.subr.mxu0 0.0
        %1415 = vmatpush1.msra.mxu0 0.0
        %1416 = vmatprep.subr.mxu0 0.0
        %1417 = vmatpush1.msra.mxu0 0.0
        %1418 = vmatprep.subr.mxu0 0.0
        %1419 = vmatpush1.msra.mxu0 0.0
        %1420 = vmatprep.subr.mxu0 0.0
        %1421 = vmatpush1.msra.mxu0 0.0
        %1422 = vmatprep.subr.mxu0 0.0
        %1423 = vmatpush1.msra.mxu0 %v1196
        %1424 = vmatprep.subr.mxu0 0.0
        %1425 = vmatpush1.msra.mxu0 %v1195
        %1426 = vmatprep.subr.mxu0 0.0
        %1427 = vmatpush2.msra.mxu0 0.0
        %1428 = vmatprep.subr.mxu0 0.0
        %1429 = vmatpush2.msra.mxu0 0.0
        %1430 = vmatprep.subr.mxu0 0.0
        %1431 = vmatpush2.msra.mxu0 0.0
        %1432 = vmatprep.subr.mxu0 0.0
        %1433 = vmatpush2.msra.mxu0 0.0
        %1434 = vmatprep.subr.mxu0 0.0
        %1435 = vmatpush2.msra.mxu0 0.0
        %1436 = vmatprep.subr.mxu0 0.0
        %1437 = vmatpush2.msra.mxu0 0.0
        %1438 = vmatprep.subr.mxu0 0.0
        %1439 = vmatpush2.msra.mxu0 0.0
        %1440 = vmatprep.subr.mxu0 0.0
        %1441 = vmatpush2.msra.mxu0 0.0
        %1442 = vmatprep.subr.mxu0 0.0
        %1443 = vmatpush2.msra.mxu0 0.0
        %1444 = vmatprep.subr.mxu0 0.0
        %1445 = vmatpush2.msra.mxu0 0.0
        %1446 = vmatprep.subr.mxu0 0.0
        %1447 = vmatpush2.msra.mxu0 0.0
        %1448 = vmatprep.subr.mxu0 0.0
        %1449 = vmatpush2.msra.mxu0 0.0
        %1450 = vmatprep.subr.mxu0 0.0
        %1451 = vmatpush2.msra.mxu0 0.0
        %1452 = vmatprep.subr.mxu0 0.0
        %1453 = vmatpush2.msra.mxu0 0.0
        %1454 = vmatprep.subr.mxu0 0.0
        %1455 = vmatpush2.msra.mxu0 0.0
        %1456 = vmatprep.subr.mxu0 0.0
        %1457 = vmatpush2.msra.mxu0 0.0
        %1458 = vmatprep.mubr.f32.mxu0 0.0
        %1459 = vmatmul.mubr.f32.gmra.mxu0 %v1389
        %v1460 = vpop.f32.mrf.mxu0
        %v1461 = vadd.f32 0.0, %v1460
        %v1462 = vpop.f32.mrf.mxu0
        %1463 = vmatprep.mubr.f32.mxu0 0.0
        %1464 = vmatmul.mubr.f32.gmra.mxu0 %v1392
        %v1465 = vpop.f32.mrf.mxu0
        %v1466 = vadd.f32 0.0, %v1465
        %v1467 = vpop.f32.mrf.mxu0
        %1468 = vdwg.mxu0
        %v1469 = vadd.f32 %v1380, %v1461
        %v1470 = vadd.f32 %v1385, %v1466
        %v1472 = vlaneseq
        %v1473 = vshrl.u32 %v1472, 7
        %v1474 = vsub.s32 0, %v1473
        %v1475 = vrot.slane %v1197, %v1474
        %v1477 = vadd.f32 %v1469, %v1475
        %v1478 = vadd.f32 %v1470, %v1475
        %v1479 = vmax.f32 %v1477, 0.0
        %v1480 = vmax.f32 %v1478, 0.0
        %v1481 = vrot.slane %v1479, 4
        %v1482 = vrot.slane %v1480, 4
        %v1483 = vsel %vm1213, %v1481, %v1482
        %v1484 = vsel %vm1213, %v1482, %v1481
        %v1485 = vsel %vm1216, %v1484, 0.0
        %v1486 = vsel %vm1217, %v1483, 0.0
        %v1487 = vrot.slane %v1479, 6
        %v1488 = vrot.slane %v1480, 6
        %v1489 = vsel %vm563, %v1487, %v1488
        %v1490 = vsel %vm563, %v1488, %v1487
        %v1491 = vsel %vm567, %v1490, 0.0
        %v1492 = vsel %vm568, %v1489, 0.0
        %vm1493 = vcmask 261120
        %v1495 = vsel %vm1493, %v1491, 0
        %v1498 = vsel %vm1493, %v1492, 0
        %1500 = vmatprep.subr.mxu0 0.0
        %1501 = vmatpush1.msra.mxu0 0.0
        %1502 = vmatprep.subr.mxu0 0.0
        %1503 = vmatpush1.msra.mxu0 0.0
        %1504 = vmatprep.subr.mxu0 0.0
        %1505 = vmatpush1.msra.mxu0 0.0
        %1506 = vmatprep.subr.mxu0 0.0
        %1507 = vmatpush1.msra.mxu0 0.0
        %1508 = vmatprep.subr.mxu0 0.0
        %1509 = vmatpush1.msra.mxu0 0.0
        %1510 = vmatprep.subr.mxu0 0.0
        %1511 = vmatpush1.msra.mxu0 0.0
        %1512 = vmatprep.subr.mxu0 0.0
        %1513 = vmatpush1.msra.mxu0 0.0
        %1514 = vmatprep.subr.mxu0 0.0
        %1515 = vmatpush1.msra.mxu0 0.0
        %1516 = vmatprep.subr.mxu0 0.0
        %1517 = vmatpush1.msra.mxu0 0.0
        %1518 = vmatprep.subr.mxu0 0.0
        %1519 = vmatpush1.msra.mxu0 0.0
        %1520 = vmatprep.subr.mxu0 0.0
        %1521 = vmatpush1.msra.mxu0 0.0
        %1522 = vmatprep.subr.mxu0 0.0
        %1523 = vmatpush1.msra.mxu0 0.0
        %1524 = vmatprep.subr.mxu0 0.0
        %1525 = vmatpush1.msra.mxu0 %v1205
        %1526 = vmatprep.subr.mxu0 0.0
        %1527 = vmatpush1.msra.mxu0 %v1204
        %1528 = vmatprep.subr.mxu0 0.0
        %1529 = vmatpush1.msra.mxu0 %v1203
        %1530 = vmatprep.subr.mxu0 0.0
        %1531 = vmatpush1.msra.mxu0 %v1202
        %1532 = vmatprep.subr.mxu0 0.0
        %1533 = vmatpush2.msra.mxu0 0.0
        %1534 = vmatprep.subr.mxu0 0.0
        %1535 = vmatpush2.msra.mxu0 0.0
        %1536 = vmatprep.subr.mxu0 0.0
        %1537 = vmatpush2.msra.mxu0 0.0
        %1538 = vmatprep.subr.mxu0 0.0
        %1539 = vmatpush2.msra.mxu0 0.0
        %1540 = vmatprep.subr.mxu0 0.0
        %1541 = vmatpush2.msra.mxu0 0.0
        %1542 = vmatprep.subr.mxu0 0.0
        %1543 = vmatpush2.msra.mxu0 0.0
        %1544 = vmatprep.subr.mxu0 0.0
        %1545 = vmatpush2.msra.mxu0 0.0
        %1546 = vmatprep.subr.mxu0 0.0
        %1547 = vmatpush2.msra.mxu0 0.0
        %1548 = vmatprep.subr.mxu0 0.0
        %1549 = vmatpush2.msra.mxu0 0.0
        %1550 = vmatprep.subr.mxu0 0.0
        %1551 = vmatpush2.msra.mxu0 0.0
        %1552 = vmatprep.subr.mxu0 0.0
        %1553 = vmatpush2.msra.mxu0 0.0
        %1554 = vmatprep.subr.mxu0 0.0
        %1555 = vmatpush2.msra.mxu0 0.0
        %1556 = vmatprep.subr.mxu0 0.0
        %1557 = vmatpush2.msra.mxu0 0.0
        %1558 = vmatprep.subr.mxu0 0.0
        %1559 = vmatpush2.msra.mxu0 0.0
        %1560 = vmatprep.subr.mxu0 0.0
        %1561 = vmatpush2.msra.mxu0 0.0
        %1562 = vmatprep.subr.mxu0 0.0
        %1563 = vmatpush2.msra.mxu0 0.0
        %1564 = vmatprep.mubr.f32.mxu0 0.0
        %1565 = vmatmul.mubr.f32.gmra.mxu0 %v1495
        %v1566 = vpop.f32.mrf.mxu0
        %v1567 = vadd.f32 0.0, %v1566
        %v1568 = vpop.f32.mrf.mxu0
        %1569 = vmatprep.mubr.f32.mxu0 0.0
        %1570 = vmatmul.mubr.f32.gmra.mxu0 %v1498
        %v1571 = vpop.f32.mrf.mxu0
        %v1572 = vadd.f32 0.0, %v1571
        %v1573 = vpop.f32.mrf.mxu0
        %1574 = vdwg.mxu0
        %v1576 = vsel %vm1493, %v1485, 0
        %v1579 = vsel %vm1493, %v1486, 0
        %1581 = vmatprep.subr.mxu0 0.0
        %1582 = vmatpush1.msra.mxu0 0.0
        %1583 = vmatprep.subr.mxu0 0.0
        %1584 = vmatpush1.msra.mxu0 0.0
        %1585 = vmatprep.subr.mxu0 0.0
        %1586 = vmatpush1.msra.mxu0 0.0
        %1587 = vmatprep.subr.mxu0 0.0
        %1588 = vmatpush1.msra.mxu0 0.0
        %1589 = vmatprep.subr.mxu0 0.0
        %1590 = vmatpush1.msra.mxu0 0.0
        %1591 = vmatprep.subr.mxu0 0.0
        %1592 = vmatpush1.msra.mxu0 0.0
        %1593 = vmatprep.subr.mxu0 0.0
        %1594 = vmatpush1.msra.mxu0 0.0
        %1595 = vmatprep.subr.mxu0 0.0
        %1596 = vmatpush1.msra.mxu0 0.0
        %1597 = vmatprep.subr.mxu0 0.0
        %1598 = vmatpush1.msra.mxu0 0.0
        %1599 = vmatprep.subr.mxu0 0.0
        %1600 = vmatpush1.msra.mxu0 0.0
        %1601 = vmatprep.subr.mxu0 0.0
        %1602 = vmatpush1.msra.mxu0 0.0
        %1603 = vmatprep.subr.mxu0 0.0
        %1604 = vmatpush1.msra.mxu0 0.0
        %1605 = vmatprep.subr.mxu0 0.0
        %1606 = vmatpush1.msra.mxu0 %v1201
        %1607 = vmatprep.subr.mxu0 0.0
        %1608 = vmatpush1.msra.mxu0 %v1200
        %1609 = vmatprep.subr.mxu0 0.0
        %1610 = vmatpush1.msra.mxu0 %v1199
        %1611 = vmatprep.subr.mxu0 0.0
        %1612 = vmatpush1.msra.mxu0 %v1198
        %1613 = vmatprep.subr.mxu0 0.0
        %1614 = vmatpush2.msra.mxu0 0.0
        %1615 = vmatprep.subr.mxu0 0.0
        %1616 = vmatpush2.msra.mxu0 0.0
        %1617 = vmatprep.subr.mxu0 0.0
        %1618 = vmatpush2.msra.mxu0 0.0
        %1619 = vmatprep.subr.mxu0 0.0
        %1620 = vmatpush2.msra.mxu0 0.0
        %1621 = vmatprep.subr.mxu0 0.0
        %1622 = vmatpush2.msra.mxu0 0.0
        %1623 = vmatprep.subr.mxu0 0.0
        %1624 = vmatpush2.msra.mxu0 0.0
        %1625 = vmatprep.subr.mxu0 0.0
        %1626 = vmatpush2.msra.mxu0 0.0
        %1627 = vmatprep.subr.mxu0 0.0
        %1628 = vmatpush2.msra.mxu0 0.0
        %1629 = vmatprep.subr.mxu0 0.0
        %1630 = vmatpush2.msra.mxu0 0.0
        %1631 = vmatprep.subr.mxu0 0.0
        %1632 = vmatpush2.msra.mxu0 0.0
        %1633 = vmatprep.subr.mxu0 0.0
        %1634 = vmatpush2.msra.mxu0 0.0
        %1635 = vmatprep.subr.mxu0 0.0
        %1636 = vmatpush2.msra.mxu0 0.0
        %1637 = vmatprep.subr.mxu0 0.0
        %1638 = vmatpush2.msra.mxu0 0.0
        %1639 = vmatprep.subr.mxu0 0.0
        %1640 = vmatpush2.msra.mxu0 0.0
        %1641 = vmatprep.subr.mxu0 0.0
        %1642 = vmatpush2.msra.mxu0 0.0
        %1643 = vmatprep.subr.mxu0 0.0
        %1644 = vmatpush2.msra.mxu0 0.0
        %1645 = vmatprep.mubr.f32.mxu0 0.0
        %1646 = vmatmul.mubr.f32.gmra.mxu0 %v1576
        %v1647 = vpop.f32.mrf.mxu0
        %v1648 = vadd.f32 %v1567, %v1647
        %v1649 = vpop.f32.mrf.mxu0
        %1650 = vmatprep.mubr.f32.mxu0 0.0
        %1651 = vmatmul.mubr.f32.gmra.mxu0 %v1579
        %v1652 = vpop.f32.mrf.mxu0
        %v1653 = vadd.f32 %v1572, %v1652
        %v1654 = vpop.f32.mrf.mxu0
        %1655 = vdwg.mxu0
        %v1657 = vsel %vm1493, %v1479, 0
        %v1660 = vsel %vm1493, %v1480, 0
        %1662 = vmatprep.subr.mxu0 0.0
        %1663 = vmatpush1.msra.mxu0 0.0
        %1664 = vmatprep.subr.mxu0 0.0
        %1665 = vmatpush1.msra.mxu0 0.0
        %1666 = vmatprep.subr.mxu0 0.0
        %1667 = vmatpush1.msra.mxu0 0.0
        %1668 = vmatprep.subr.mxu0 0.0
        %1669 = vmatpush1.msra.mxu0 0.0
        %1670 = vmatprep.subr.mxu0 0.0
        %1671 = vmatpush1.msra.mxu0 0.0
        %1672 = vmatprep.subr.mxu0 0.0
        %1673 = vmatpush1.msra.mxu0 0.0
        %1674 = vmatprep.subr.mxu0 0.0
        %1675 = vmatpush1.msra.mxu0 0.0
        %1676 = vmatprep.subr.mxu0 0.0
        %1677 = vmatpush1.msra.mxu0 0.0
        %1678 = vmatprep.subr.mxu0 0.0
        %1679 = vmatpush1.msra.mxu0 0.0
        %1680 = vmatprep.subr.mxu0 0.0
        %1681 = vmatpush1.msra.mxu0 0.0
        %1682 = vmatprep.subr.mxu0 0.0
        %1683 = vmatpush1.msra.mxu0 0.0
        %1684 = vmatprep.subr.mxu0 0.0
        %1685 = vmatpush1.msra.mxu0 0.0
        %1686 = vmatprep.subr.mxu0 0.0
        %1687 = vmatpush1.msra.mxu0 %v1209
        %1688 = vmatprep.subr.mxu0 0.0
        %1689 = vmatpush1.msra.mxu0 %v1208
        %1690 = vmatprep.subr.mxu0 0.0
        %1691 = vmatpush1.msra.mxu0 %v1207
        %1692 = vmatprep.subr.mxu0 0.0
        %1693 = vmatpush1.msra.mxu0 %v1206
        %1694 = vmatprep.subr.mxu0 0.0
        %1695 = vmatpush2.msra.mxu0 0.0
        %1696 = vmatprep.subr.mxu0 0.0
        %1697 = vmatpush2.msra.mxu0 0.0
        %1698 = vmatprep.subr.mxu0 0.0
        %1699 = vmatpush2.msra.mxu0 0.0
        %1700 = vmatprep.subr.mxu0 0.0
        %1701 = vmatpush2.msra.mxu0 0.0
        %1702 = vmatprep.subr.mxu0 0.0
        %1703 = vmatpush2.msra.mxu0 0.0
        %1704 = vmatprep.subr.mxu0 0.0
        %1705 = vmatpush2.msra.mxu0 0.0
        %1706 = vmatprep.subr.mxu0 0.0
        %1707 = vmatpush2.msra.mxu0 0.0
        %1708 = vmatprep.subr.mxu0 0.0
        %1709 = vmatpush2.msra.mxu0 0.0
        %1710 = vmatprep.subr.mxu0 0.0
        %1711 = vmatpush2.msra.mxu0 0.0
        %1712 = vmatprep.subr.mxu0 0.0
        %1713 = vmatpush2.msra.mxu0 0.0
        %1714 = vmatprep.subr.mxu0 0.0
        %1715 = vmatpush2.msra.mxu0 0.0
        %1716 = vmatprep.subr.mxu0 0.0
        %1717 = vmatpush2.msra.mxu0 0.0
        %1718 = vmatprep.subr.mxu0 0.0
        %1719 = vmatpush2.msra.mxu0 0.0
        %1720 = vmatprep.subr.mxu0 0.0
        %1721 = vmatpush2.msra.mxu0 0.0
        %1722 = vmatprep.subr.mxu0 0.0
        %1723 = vmatpush2.msra.mxu0 0.0
        %1724 = vmatprep.subr.mxu0 0.0
        %1725 = vmatpush2.msra.mxu0 0.0
        %1726 = vmatprep.mubr.f32.mxu0 0.0
        %1727 = vmatmul.mubr.f32.gmra.mxu0 %v1657
        %v1728 = vpop.f32.mrf.mxu0
        %v1729 = vadd.f32 0.0, %v1728
        %v1730 = vpop.f32.mrf.mxu0
        %1731 = vmatprep.mubr.f32.mxu0 0.0
        %1732 = vmatmul.mubr.f32.gmra.mxu0 %v1660
        %v1733 = vpop.f32.mrf.mxu0
        %v1734 = vadd.f32 0.0, %v1733
        %v1735 = vpop.f32.mrf.mxu0
        %1736 = vdwg.mxu0
        %v1737 = vadd.f32 %v1648, %v1729
        %v1738 = vadd.f32 %v1653, %v1734
        %v1740 = vlaneseq
        %v1741 = vshrl.u32 %v1740, 7
        %v1742 = vsub.s32 0, %v1741
        %v1743 = vrot.slane %v1210, %v1742
        %v1745 = vadd.f32 %v1737, %v1743
        %v1746 = vadd.f32 %v1738, %v1743
        %v1747 = vmax.f32 %v1745, 0.0
        %v1748 = vmax.f32 %v1746, 0.0
        %v1749 = vld [vmem:[%s11] sm:$0xff]
        %v1750 = vld [vmem:[%s11 + $0x8] sm:$0xff]
        %v1751 = vld [vmem:[%s12] sm:$0x1]
        %v1753 = vlaneseq
        %v1754 = vshrl.u32 %v1753, 7
        %v1755 = vsub.s32 0, %v1754
        %v1756 = vrot.slane %v1751, %v1755
        %1758 = vmatprep.subr.mxu0 0.0
        %1759 = vmatpush1.msra.mxu0 0.0
        %1760 = vmatprep.subr.mxu0 0.0
        %1761 = vmatpush1.msra.mxu0 0.0
        %1762 = vmatprep.subr.mxu0 0.0
        %1763 = vmatpush1.msra.mxu0 0.0
        %1764 = vmatprep.subr.mxu0 0.0
        %1765 = vmatpush1.msra.mxu0 0.0
        %1766 = vmatprep.subr.mxu0 0.0
        %1767 = vmatpush1.msra.mxu0 0.0
        %1768 = vmatprep.subr.mxu0 0.0
        %1769 = vmatpush1.msra.mxu0 0.0
        %1770 = vmatprep.subr.mxu0 0.0
        %1771 = vmatpush1.msra.mxu0 0.0
        %1772 = vmatprep.subr.mxu0 0.0
        %1773 = vmatpush1.msra.mxu0 0.0
        %1774 = vmatprep.subr.mxu0 0.0
        %1775 = vmatpush1.msra.mxu0 0.0
        %1776 = vmatprep.subr.mxu0 0.0
        %1777 = vmatpush1.msra.mxu0 0.0
        %1778 = vmatprep.subr.mxu0 0.0
        %1779 = vmatpush1.msra.mxu0 0.0
        %1780 = vmatprep.subr.mxu0 0.0
        %1781 = vmatpush1.msra.mxu0 0.0
        %1782 = vmatprep.subr.mxu0 0.0
        %1783 = vmatpush1.msra.mxu0 0.0
        %1784 = vmatprep.subr.mxu0 0.0
        %1785 = vmatpush1.msra.mxu0 0.0
        %1786 = vmatprep.subr.mxu0 0.0
        %1787 = vmatpush1.msra.mxu0 %v1750
        %1788 = vmatprep.subr.mxu0 0.0
        %1789 = vmatpush1.msra.mxu0 %v1749
        %1790 = vmatprep.subr.mxu0 0.0
        %1791 = vmatpush2.msra.mxu0 0.0
        %1792 = vmatprep.subr.mxu0 0.0
        %1793 = vmatpush2.msra.mxu0 0.0
        %1794 = vmatprep.subr.mxu0 0.0
        %1795 = vmatpush2.msra.mxu0 0.0
        %1796 = vmatprep.subr.mxu0 0.0
        %1797 = vmatpush2.msra.mxu0 0.0
        %1798 = vmatprep.subr.mxu0 0.0
        %1799 = vmatpush2.msra.mxu0 0.0
        %1800 = vmatprep.subr.mxu0 0.0
        %1801 = vmatpush2.msra.mxu0 0.0
        %1802 = vmatprep.subr.mxu0 0.0
        %1803 = vmatpush2.msra.mxu0 0.0
        %1804 = vmatprep.subr.mxu0 0.0
        %1805 = vmatpush2.msra.mxu0 0.0
        %1806 = vmatprep.subr.mxu0 0.0
        %1807 = vmatpush2.msra.mxu0 0.0
        %1808 = vmatprep.subr.mxu0 0.0
        %1809 = vmatpush2.msra.mxu0 0.0
        %1810 = vmatprep.subr.mxu0 0.0
        %1811 = vmatpush2.msra.mxu0 0.0
        %1812 = vmatprep.subr.mxu0 0.0
        %1813 = vmatpush2.msra.mxu0 0.0
        %1814 = vmatprep.subr.mxu0 0.0
        %1815 = vmatpush2.msra.mxu0 0.0
        %1816 = vmatprep.subr.mxu0 0.0
        %1817 = vmatpush2.msra.mxu0 0.0
        %1818 = vmatprep.subr.mxu0 0.0
        %1819 = vmatpush2.msra.mxu0 0.0
        %1820 = vmatprep.subr.mxu0 0.0
        %1821 = vmatpush2.msra.mxu0 0.0
        %1822 = vmatprep.mubr.f32.mxu0 0.0
        %1823 = vmatmul.mubr.f32.gmra.mxu0 %v1389
        %v1824 = vpop.f32.mrf.mxu0
        %v1825 = vadd.f32 %v1756, %v1824
        %v1826 = vpop.f32.mrf.mxu0
        %1827 = vmatprep.mubr.f32.mxu0 0.0
        %1828 = vmatmul.mubr.f32.gmra.mxu0 %v1392
        %v1829 = vpop.f32.mrf.mxu0
        %v1830 = vadd.f32 %v1756, %v1829
        %v1831 = vpop.f32.mrf.mxu0
        %1832 = vdwg.mxu0
        %v1833 = vadd.f32 %v1747, %v1825
        %v1834 = vadd.f32 %v1748, %v1830
        %v1835 = vmax.f32 %v1833, 0.0
        %v1836 = vmax.f32 %v1834, 0.0
        %1837 = vst.msk [vmem:[%s540] sm:$0xff] %vm1493, %v1835
        %1838 = vst.msk [vmem:[%s540 + $0x8] sm:$0xff] %vm1493, %v1836
        %s1839 = sand.u32 %s318, 1
        %s1840 = scalar_lea.sflag [#allocation4], %s1839
        %s1841 = sand.u32 %s318, 1
        %s1842 = smul.addr %s1841, 16
        %s1843 = scalar_lea.vmem [#allocation16], %s1842
        // Predicated region
        $region105: #{tpu_custom_call.1} parent=71 // pred_check
          %p1844 = pneg %p328
        $region106: #{tpu_custom_call.1} parent=71 // pred_check_branch
          %1846 = sbr.rel (%p1844) target = $region108
        $region107: #{tpu_custom_call.1} parent=71 // pred_region
          %s1848 = ssub.s32 256, 256
          %1849 = vsyncadd %s1840, %s1848
          %s1850 = smul.addr %s32, 2
          %s1851 = smul.addr %s1850, 128
          %s1852 = scalar_lea.hbm %s13, %s1851
          %s1853 = sshll.u32 %s1843, 4
          %s1854 = int_to_ptr.vmem [resolvable:$true] %s1853
          %1859 = dma.vmem_to_hbm [thread:$0]  %s1854, 256, %s1852, %s1840, 128, 128, 8
        $region108: #{tpu_custom_call.1} parent=71 // pred_fallthru
          _
      $region72: #{tpu_custom_call.1} parent=5 // pred_fallthru
        _
      %p1860 = scmp.le.s32.totalorder 2, %s27
      // Predicated region
      $region109: #{tpu_custom_call.1} parent=5 // pred_check
        %p1861 = pneg %p1860
      $region110: #{tpu_custom_call.1} parent=5 // pred_check_branch
        %1863 = sbr.rel (%p1861) target = $region112
      $region111: #{tpu_custom_call.1} parent=5 // pred_region
        %s1864 = ssub.s32 %s27, 2
        // Predicated region
        $region113: #{tpu_custom_call.1} parent=111 // pred_check
          %p1865 = pneg %p334
        $region114: #{tpu_custom_call.1} parent=111 // pred_check_branch
          %1867 = sbr.rel (%p1865) target = $region116
        $region115: #{tpu_custom_call.1} parent=111 // pred_region
          %s1868 = sand.u32 %s319, 1
          %s1869 = scalar_lea.sflag [#allocation4], %s1868
          %s1870 = sand.u32 %s319, 1
          %s1871 = smul.addr %s1870, 16
          %s1872 = scalar_lea.vmem [#allocation16], %s1871
          %1873 = dma.done %s1869, 256
        $region116: #{tpu_custom_call.1} parent=111 // pred_fallthru
          _
      $region112: #{tpu_custom_call.1} parent=5 // pred_fallthru
        _
    $region6: #{tpu_custom_call.1} parent=1 // loop_footer
      %s31 = sadd.s32 1, %s27
    $region7: #{tpu_custom_call.1} parent=1 // loop_footer_branch
      %26 = sbr.rel target = $region3
    $region8: #{tpu_custom_call.1} parent=1 // loop_exit
      _
    %1874 = vsyncpa [#allocation3], 1
    %s1875 = scalar_lea.sflag [#allocation3], 1
    %1876 = vsyncpa %s1875, 1
    %1877 = vsyncpa [#allocation6], 1
    %1878 = vsyncpa [#allocation9], 1
    %1879 = vsyncpa [#allocation12], 1
    %1880 = vsyncpa [#allocation15], 1
    %1881 = vsyncpa [#allocation4], 1
    %s1882 = scalar_lea.sflag [#allocation4], 1
    %1883 = vsyncpa %s1882, 1

</llo_original>
